<compile_context>
chip_gen: v7x
topology: tpu7x:2x2x1
jax: 0.10.0
libtpu: 0.0.40
codegen_flags: <defaults>
</compile_context>

<pallas_src>
import functools

import jax
import jax.numpy as jnp
from jax.experimental import pallas as pl
from jax.experimental.pallas import tpu as pltpu

LN_EPS = 1e-5  # torch.nn.LayerNorm default


def _make_mlp_kernel(num_h_layers: int, add_residual: bool):
    """Build a fused kernel for one (TM, input_dim) row tile.

    Ref order: x, (w_0, b_0), ..., (w_{L-1}, b_{L-1}), (w_L, b_L[+b_res]),
               [w_res], gamma, beta, out
    """

    def kernel(*refs):
        x_ref = refs[0]
        gamma_ref, beta_ref = refs[-3], refs[-2]
        out_ref = refs[-1]

        x = x_ref[...].astype(jnp.float32)

        # Hidden stack: fc_i + relu_i
        h = x
        idx = 1
        for _ in range(num_h_layers):
            w_ref, b_ref = refs[idx], refs[idx + 1]
            idx += 2
            h = jnp.dot(h, w_ref[...], preferred_element_type=jnp.float32) + b_ref[...]
            h = jnp.maximum(h, 0.0)

        # Final fc (bias already has the residual bias pre-summed when add_residual).
        w_ref, b_ref = refs[idx], refs[idx + 1]
        idx += 2
        z = jnp.dot(h, w_ref[...], preferred_element_type=jnp.float32) + b_ref[...]

        if add_residual:
            # Residual branch kept as a second MXU push; minor-dim concat of the
            # 32/16-wide operands is not reliably cheaper at these widths.
            wr_ref = refs[idx]
            z = z + jnp.dot(x, wr_ref[...], preferred_element_type=jnp.float32)

        # LayerNorm over the last dim (biased variance, matching torch.nn.LayerNorm).
        mean = jnp.mean(z, axis=-1, keepdims=True)
        centered = z - mean
        var = jnp.mean(centered * centered, axis=-1, keepdims=True)
        out = centered * jax.lax.rsqrt(var + LN_EPS) * gamma_ref[...] + beta_ref[...]

        out_ref[...] = out.astype(out_ref.dtype)

    return kernel


@functools.partial(jax.jit, static_argnames=("tm",))
def mlp_forward(x, params, *, tm=None):
    """x: (B, input_dim) float32.  params: dict from init_params (pre-transposed W)."""
    B, input_dim = x.shape
    weights = params["weights"]
    biases = list(params["biases"])
    add_residual = "w_res" in params
    num_h_layers = len(weights) - 1
    output_dim = weights[-1].shape[1]

    # Pre-fuse the residual bias into the final-layer bias (one bias add removed).
    if add_residual:
        biases[-1] = biases[-1] + params["b_res"]

    # Adaptive row tile: multiple of 8 sublanes, single grid step up to 512 rows.
    if tm is None:
        tm = min(512, ((B + 7) // 8) * 8)
    num_tiles = pl.cdiv(B, tm)
    b_pad = num_tiles * tm
    if b_pad != B:
        # Zero rows are harmless (LayerNorm of a constant row is finite) and sliced off.
        x = jnp.pad(x, ((0, b_pad - B), (0, 0)))

    def tiled_rows(shape):
        # x / out: new row block each grid step.
        return pl.BlockSpec(shape, lambda i: (i, 0))

    def resident(arr):
        # weights / biases / LN params: same (only) block every step -> VMEM-resident.
        return pl.BlockSpec(arr.shape, lambda i: (0, 0))

    operands = [x]
    in_specs = [tiled_rows((tm, input_dim))]
    for w, b in zip(weights, biases):
        operands += [w, b]
        in_specs += [resident(w), resident(b)]
    if add_residual:
        operands.append(params["w_res"])
        in_specs.append(resident(params["w_res"]))
    operands += [params["gamma"], params["beta"]]
    in_specs += [resident(params["gamma"]), resident(params["beta"])]

    out = pl.pallas_call(
        _make_mlp_kernel(num_h_layers, add_residual),
        out_shape=jax.ShapeDtypeStruct((b_pad, output_dim), x.dtype),
        grid=(num_tiles,),
        in_specs=in_specs,
        out_specs=tiled_rows((tm, output_dim)),
        compiler_params=pltpu.CompilerParams(
            dimension_semantics=("parallel",)),
    )(*operands)

    return out[:B] if b_pad != B else out


def init_params(key, input_dim, output_dim, h_dim, num_h_layers, add_residual):
    """Deterministic synthetic parameters; shapes mirror the PyTorch module."""
    n_lin = (num_h_layers + 1) + (1 if add_residual else 0)
    ks = jax.random.split(key, 2 * n_lin)

    def linear(kw, kb, fan_in, fan_out):
        # PyTorch nn.Linear init: U(-1/sqrt(fan_in), 1/sqrt(fan_in)).
        bound = 1.0 / jnp.sqrt(fan_in)
        w = jax.random.uniform(kw, (fan_in, fan_out), jnp.float32, -bound, bound)
        b = jax.random.uniform(kb, (1, fan_out), jnp.float32, -bound, bound)
        return w, b

    dims = []
    if num_h_layers > 0:
        dims.append((input_dim, h_dim))
        for _ in range(1, num_h_layers):
            dims.append((h_dim, h_dim))
        dims.append((h_dim, output_dim))
    else:
        dims.append((input_dim, output_dim))

    weights, biases = [], []
    for li, (fi, fo) in enumerate(dims):
        w, b = linear(ks[2 * li], ks[2 * li + 1], fi, fo)
        weights.append(w)
        biases.append(b)

    params = dict(weights=weights, biases=biases,
                  gamma=jnp.ones((1, output_dim), jnp.float32),
                  beta=jnp.zeros((1, output_dim), jnp.float32))
    if add_residual:
        wr, br = linear(ks[-2], ks[-1], input_dim, output_dim)
        params["w_res"] = wr
        params["b_res"] = br
    return params


def mlp_reference(x, params):
    """Pure-JAX reference of the un-fused forward pass."""
    weights, biases = params["weights"], params["biases"]
    h = x
    for w, b in zip(weights[:-1], biases[:-1]):
        h = jnp.maximum(h @ w + b, 0.0)
    z = h @ weights[-1] + biases[-1]
    if "w_res" in params:
        z = z + x @ params["w_res"] + params["b_res"]
    mean = jnp.mean(z, axis=-1, keepdims=True)
    var = jnp.mean((z - mean) ** 2, axis=-1, keepdims=True)
    return (z - mean) * jax.lax.rsqrt(var + LN_EPS) * params["gamma"] + params["beta"]


if __name__ == "__main__":
    key = jax.random.PRNGKey(0)

    # Main config: matches the module's documented use (2 hidden layers + residual).
    batch, input_dim, h_dim, output_dim = 256, 16, 32, 16
    k_x, k_p, k_x2, k_p2 = jax.random.split(key, 4)
    x = jax.random.normal(k_x, (batch, input_dim), jnp.float32)
    params = init_params(k_p, input_dim, output_dim, h_dim,
                         num_h_layers=2, add_residual=True)
    out = jax.block_until_ready(mlp_forward(x, params))
    ref = mlp_reference(x, params)
    assert out.shape == (batch, output_dim)
    assert jnp.allclose(out, ref, atol=1e-4, rtol=1e-4), "mismatch vs reference (cfg 1)"

    # Secondary config: ragged batch (exercises padding), no hidden layers, no residual.
    batch2 = 37
    x2 = jax.random.normal(k_x2, (batch2, input_dim), jnp.float32)
    params2 = init_params(k_p2, input_dim, output_dim, h_dim,
                          num_h_layers=0, add_residual=False)
    out2 = jax.block_until_ready(mlp_forward(x2, params2))
    ref2 = mlp_reference(x2, params2)
    assert out2.shape == (batch2, output_dim)
    assert jnp.allclose(out2, ref2, atol=1e-4, rtol=1e-4), "mismatch vs reference (cfg 2)"

    print("KERNEL_OK")
</pallas_src>

<mosaic_0001>
module attributes {stable_mosaic.version = 11 : i64} {
  func.func @kernel(%arg0: i32, %arg1: memref<256x16xf32, #tpu.memory_space<vmem>>, %arg2: memref<16x32xf32, #tpu.memory_space<vmem>>, %arg3: memref<1x32xf32, #tpu.memory_space<vmem>>, %arg4: memref<32x32xf32, #tpu.memory_space<vmem>>, %arg5: memref<1x32xf32, #tpu.memory_space<vmem>>, %arg6: memref<32x16xf32, #tpu.memory_space<vmem>>, %arg7: memref<1x16xf32, #tpu.memory_space<vmem>>, %arg8: memref<16x16xf32, #tpu.memory_space<vmem>>, %arg9: memref<1x16xf32, #tpu.memory_space<vmem>>, %arg10: memref<1x16xf32, #tpu.memory_space<vmem>>, %arg11: memref<256x16xf32, #tpu.memory_space<vmem>>) attributes {dimension_semantics = [#tpu.dimension_semantics<parallel>], iteration_bounds = array<i64: 1>, scalar_prefetch = 0 : i64, scratch_operands = 0 : i64, tpu.core_type = #tpu.core_type<tc>, window_params = [{transform_indices = @transform_0, window_bounds = array<i64: 256, 16>}, {pipeline_mode = #tpu.pipeline_mode<synchronous>, transform_indices = @transform_1, window_bounds = array<i64: 16, 32>}, {pipeline_mode = #tpu.pipeline_mode<synchronous>, transform_indices = @transform_2, window_bounds = array<i64: 1, 32>}, {pipeline_mode = #tpu.pipeline_mode<synchronous>, transform_indices = @transform_3, window_bounds = array<i64: 32, 32>}, {pipeline_mode = #tpu.pipeline_mode<synchronous>, transform_indices = @transform_4, window_bounds = array<i64: 1, 32>}, {pipeline_mode = #tpu.pipeline_mode<synchronous>, transform_indices = @transform_5, window_bounds = array<i64: 32, 16>}, {pipeline_mode = #tpu.pipeline_mode<synchronous>, transform_indices = @transform_6, window_bounds = array<i64: 1, 16>}, {pipeline_mode = #tpu.pipeline_mode<synchronous>, transform_indices = @transform_7, window_bounds = array<i64: 16, 16>}, {pipeline_mode = #tpu.pipeline_mode<synchronous>, transform_indices = @transform_8, window_bounds = array<i64: 1, 16>}, {pipeline_mode = #tpu.pipeline_mode<synchronous>, transform_indices = @transform_9, window_bounds = array<i64: 1, 16>}, {transform_indices = @transform_10, window_bounds = array<i64: 256, 16>}]} {
    %c0 = arith.constant 0 : index
    %c0_0 = arith.constant 0 : index
    %0 = vector.load %arg1[%c0, %c0_0] : memref<256x16xf32, #tpu.memory_space<vmem>>, vector<256x16xf32>
    %c0_1 = arith.constant 0 : index
    %c0_2 = arith.constant 0 : index
    %1 = vector.load %arg2[%c0_1, %c0_2] : memref<16x32xf32, #tpu.memory_space<vmem>>, vector<16x32xf32>
    %cst = arith.constant dense<0.000000e+00> : vector<256x32xf32>
    %2 = tpu.matmul %0, %1, %cst {dimension_numbers = #tpu.dot_dimension_numbers<[1], [0], [0], [1], [0, 0, 1, 1], [], []>} : vector<256x16xf32>, vector<16x32xf32>, vector<256x32xf32> -> vector<256x32xf32>
    %c0_3 = arith.constant 0 : index
    %c0_4 = arith.constant 0 : index
    %3 = vector.load %arg3[%c0_3, %c0_4] : memref<1x32xf32, #tpu.memory_space<vmem>>, vector<1x32xf32>
    %4 = vector.broadcast %3 : vector<1x32xf32> to vector<256x32xf32>
    %5 = arith.addf %2, %4 : vector<256x32xf32>
    %cst_5 = arith.constant 0.000000e+00 : f32
    %6 = vector.broadcast %cst_5 : f32 to vector<256x32xf32>
    %7 = arith.maximumf %5, %6 : vector<256x32xf32>
    %c0_6 = arith.constant 0 : index
    %c0_7 = arith.constant 0 : index
    %8 = vector.load %arg4[%c0_6, %c0_7] : memref<32x32xf32, #tpu.memory_space<vmem>>, vector<32x32xf32>
    %cst_8 = arith.constant dense<0.000000e+00> : vector<256x32xf32>
    %9 = tpu.matmul %7, %8, %cst_8 {dimension_numbers = #tpu.dot_dimension_numbers<[1], [0], [0], [1], [0, 0, 1, 1], [], []>} : vector<256x32xf32>, vector<32x32xf32>, vector<256x32xf32> -> vector<256x32xf32>
    %c0_9 = arith.constant 0 : index
    %c0_10 = arith.constant 0 : index
    %10 = vector.load %arg5[%c0_9, %c0_10] : memref<1x32xf32, #tpu.memory_space<vmem>>, vector<1x32xf32>
    %11 = vector.broadcast %10 : vector<1x32xf32> to vector<256x32xf32>
    %12 = arith.addf %9, %11 : vector<256x32xf32>
    %cst_11 = arith.constant 0.000000e+00 : f32
    %13 = vector.broadcast %cst_11 : f32 to vector<256x32xf32>
    %14 = arith.maximumf %12, %13 : vector<256x32xf32>
    %c0_12 = arith.constant 0 : index
    %c0_13 = arith.constant 0 : index
    %15 = vector.load %arg6[%c0_12, %c0_13] : memref<32x16xf32, #tpu.memory_space<vmem>>, vector<32x16xf32>
    %cst_14 = arith.constant dense<0.000000e+00> : vector<256x16xf32>
    %16 = tpu.matmul %14, %15, %cst_14 {dimension_numbers = #tpu.dot_dimension_numbers<[1], [0], [0], [1], [0, 0, 1, 1], [], []>} : vector<256x32xf32>, vector<32x16xf32>, vector<256x16xf32> -> vector<256x16xf32>
    %c0_15 = arith.constant 0 : index
    %c0_16 = arith.constant 0 : index
    %17 = vector.load %arg7[%c0_15, %c0_16] : memref<1x16xf32, #tpu.memory_space<vmem>>, vector<1x16xf32>
    %18 = vector.broadcast %17 : vector<1x16xf32> to vector<256x16xf32>
    %19 = arith.addf %16, %18 : vector<256x16xf32>
    %c0_17 = arith.constant 0 : index
    %c0_18 = arith.constant 0 : index
    %20 = vector.load %arg8[%c0_17, %c0_18] : memref<16x16xf32, #tpu.memory_space<vmem>>, vector<16x16xf32>
    %cst_19 = arith.constant dense<0.000000e+00> : vector<256x16xf32>
    %21 = tpu.matmul %0, %20, %cst_19 {dimension_numbers = #tpu.dot_dimension_numbers<[1], [0], [0], [1], [0, 0, 1, 1], [], []>} : vector<256x16xf32>, vector<16x16xf32>, vector<256x16xf32> -> vector<256x16xf32>
    %22 = arith.addf %19, %21 : vector<256x16xf32>
    %cst_20 = arith.constant dense<0.000000e+00> : vector<256xf32>
    %23 = vector.multi_reduction <add>, %22, %cst_20 [1] : vector<256x16xf32> to vector<256xf32>
    %24 = vector.shape_cast %23 : vector<256xf32> to vector<256x1xf32>
    %cst_21 = arith.constant 1.600000e+01 : f32
    %25 = vector.broadcast %cst_21 : f32 to vector<256x1xf32>
    %26 = arith.divf %24, %25 : vector<256x1xf32>
    %27 = vector.broadcast %26 : vector<256x1xf32> to vector<256x16xf32>
    %28 = arith.subf %22, %27 : vector<256x16xf32>
    %29 = arith.mulf %28, %28 : vector<256x16xf32>
    %cst_22 = arith.constant dense<0.000000e+00> : vector<256xf32>
    %30 = vector.multi_reduction <add>, %29, %cst_22 [1] : vector<256x16xf32> to vector<256xf32>
    %31 = vector.shape_cast %30 : vector<256xf32> to vector<256x1xf32>
    %cst_23 = arith.constant 1.600000e+01 : f32
    %32 = vector.broadcast %cst_23 : f32 to vector<256x1xf32>
    %33 = arith.divf %31, %32 : vector<256x1xf32>
    %cst_24 = arith.constant 9.99999974E-6 : f32
    %34 = vector.broadcast %cst_24 : f32 to vector<256x1xf32>
    %35 = arith.addf %33, %34 : vector<256x1xf32>
    %36 = math.rsqrt %35 : vector<256x1xf32>
    %37 = vector.broadcast %36 : vector<256x1xf32> to vector<256x16xf32>
    %38 = arith.mulf %28, %37 : vector<256x16xf32>
    %c0_25 = arith.constant 0 : index
    %c0_26 = arith.constant 0 : index
    %39 = vector.load %arg9[%c0_25, %c0_26] : memref<1x16xf32, #tpu.memory_space<vmem>>, vector<1x16xf32>
    %40 = vector.broadcast %39 : vector<1x16xf32> to vector<256x16xf32>
    %41 = arith.mulf %38, %40 : vector<256x16xf32>
    %c0_27 = arith.constant 0 : index
    %c0_28 = arith.constant 0 : index
    %42 = vector.load %arg10[%c0_27, %c0_28] : memref<1x16xf32, #tpu.memory_space<vmem>>, vector<1x16xf32>
    %43 = vector.broadcast %42 : vector<1x16xf32> to vector<256x16xf32>
    %44 = arith.addf %41, %43 : vector<256x16xf32>
    %c0_29 = arith.constant 0 : index
    %c0_30 = arith.constant 0 : index
    %45 = vector.load %arg11[%c0_29, %c0_30] : memref<256x16xf32, #tpu.memory_space<vmem>>, vector<256x16xf32>
    tpu.vector_store %arg11[%c0_29, %c0_30], %44 {strides = array<i32>} : memref<256x16xf32, #tpu.memory_space<vmem>>, vector<256x16xf32>,
    return
  }
  func.func @transform_0(%arg0: i32) -> (i32, i32) {
    %c0_i32 = arith.constant 0 : i32
    %c0_i32_0 = arith.constant 0 : i32
    return %arg0, %c0_i32 : i32, i32
  }
  func.func @transform_1(%arg0: i32) -> (i32, i32) {
    %c0_i32 = arith.constant 0 : i32
    %c0_i32_0 = arith.constant 0 : i32
    %c0_i32_1 = arith.constant 0 : i32
    return %c0_i32, %c0_i32_0 : i32, i32
  }
  func.func @transform_2(%arg0: i32) -> (i32, i32) {
    %c0_i32 = arith.constant 0 : i32
    %c0_i32_0 = arith.constant 0 : i32
    %c0_i32_1 = arith.constant 0 : i32
    return %c0_i32, %c0_i32_0 : i32, i32
  }
  func.func @transform_3(%arg0: i32) -> (i32, i32) {
    %c0_i32 = arith.constant 0 : i32
    %c0_i32_0 = arith.constant 0 : i32
    %c0_i32_1 = arith.constant 0 : i32
    return %c0_i32, %c0_i32_0 : i32, i32
  }
  func.func @transform_4(%arg0: i32) -> (i32, i32) {
    %c0_i32 = arith.constant 0 : i32
    %c0_i32_0 = arith.constant 0 : i32
    %c0_i32_1 = arith.constant 0 : i32
    return %c0_i32, %c0_i32_0 : i32, i32
  }
  func.func @transform_5(%arg0: i32) -> (i32, i32) {
    %c0_i32 = arith.constant 0 : i32
    %c0_i32_0 = arith.constant 0 : i32
    %c0_i32_1 = arith.constant 0 : i32
    return %c0_i32, %c0_i32_0 : i32, i32
  }
  func.func @transform_6(%arg0: i32) -> (i32, i32) {
    %c0_i32 = arith.constant 0 : i32
    %c0_i32_0 = arith.constant 0 : i32
    %c0_i32_1 = arith.constant 0 : i32
    return %c0_i32, %c0_i32_0 : i32, i32
  }
  func.func @transform_7(%arg0: i32) -> (i32, i32) {
    %c0_i32 = arith.constant 0 : i32
    %c0_i32_0 = arith.constant 0 : i32
    %c0_i32_1 = arith.constant 0 : i32
    return %c0_i32, %c0_i32_0 : i32, i32
  }
  func.func @transform_8(%arg0: i32) -> (i32, i32) {
    %c0_i32 = arith.constant 0 : i32
    %c0_i32_0 = arith.constant 0 : i32
    %c0_i32_1 = arith.constant 0 : i32
    return %c0_i32, %c0_i32_0 : i32, i32
  }
  func.func @transform_9(%arg0: i32) -> (i32, i32) {
    %c0_i32 = arith.constant 0 : i32
    %c0_i32_0 = arith.constant 0 : i32
    %c0_i32_1 = arith.constant 0 : i32
    return %c0_i32, %c0_i32_0 : i32, i32
  }
  func.func @transform_10(%arg0: i32) -> (i32, i32) {
    %c0_i32 = arith.constant 0 : i32
    %c0_i32_0 = arith.constant 0 : i32
    return %arg0, %c0_i32 : i32, i32
  }
}

</mosaic_0001>

<llo_original>
// kernel: mlp_forward.1
$region0: #{mlp_forward.1}
  #allocation0 [shape = 'u32[]', space=smem, size = 0x4, offset = 0x4, fixed_abs, tag = 'smem constant byte address 0x4 - core index']
  #allocation1 [shape = 'u32[144,128]{1,0:T(1,128)}', space=vmem, size = 0x12000, scoped, tag = 'internal scratch']
  %s0 = inlined_call_operand.vmem [shape: f32[256,16], index: 0, kind: input, shape index: {}]
  %s1 = inlined_call_operand.vmem [shape: f32[16,32], index: 1, kind: input, shape index: {}]
  %s2 = inlined_call_operand.vmem [shape: f32[1,32], index: 2, kind: input, shape index: {}]
  %s3 = inlined_call_operand.vmem [shape: f32[32,32], index: 3, kind: input, shape index: {}]
  %s4 = inlined_call_operand.vmem [shape: f32[1,32], index: 4, kind: input, shape index: {}]
  %s5 = inlined_call_operand.vmem [shape: f32[32,16], index: 5, kind: input, shape index: {}]
  %s6 = inlined_call_operand.vmem [shape: f32[1,16], index: 6, kind: input, shape index: {}]
  %s7 = inlined_call_operand.vmem [shape: f32[16,16], index: 7, kind: input, shape index: {}]
  %s8 = inlined_call_operand.vmem [shape: f32[1,16], index: 8, kind: input, shape index: {}]
  %s9 = inlined_call_operand.vmem [shape: f32[1,16], index: 9, kind: input, shape index: {}]
  %s10 = inlined_call_operand.vmem [shape: f32[256,16], index: 10, kind: output, shape index: {}]
  %s11 = sld [smem:[#allocation0]]
  $region50: #{mlp_forward.1} parent=0
    _
  %s13 = ssub.s32 1, %s11
  %s14 = scalar_select 0, %s13, %s11
  // Predicated region
  $region2: #{mlp_forward.1} parent=0 // pred_check
    _
  $region3: #{mlp_forward.1} parent=0 // pred_check_branch
    %16 = sbr.rel (0) target = $region5
  $region4: #{mlp_forward.1} parent=0 // pred_region
    _
  $region5: #{mlp_forward.1} parent=0 // pred_fallthru
    _
  // Predicated region
  $region6: #{mlp_forward.1} parent=0 // pred_check
    _
  $region7: #{mlp_forward.1} parent=0 // pred_check_branch
    %18 = sbr.rel (0) target = $region9
  $region8: #{mlp_forward.1} parent=0 // pred_region
    _
  $region9: #{mlp_forward.1} parent=0 // pred_fallthru
    _
  // Predicated region
  $region10: #{mlp_forward.1} parent=0 // pred_check
    _
  $region11: #{mlp_forward.1} parent=0 // pred_check_branch
    %20 = sbr.rel (0) target = $region13
  $region12: #{mlp_forward.1} parent=0 // pred_region
    _
  $region13: #{mlp_forward.1} parent=0 // pred_fallthru
    _
  // Predicated region
  $region14: #{mlp_forward.1} parent=0 // pred_check
    _
  $region15: #{mlp_forward.1} parent=0 // pred_check_branch
    %22 = sbr.rel (0) target = $region17
  $region16: #{mlp_forward.1} parent=0 // pred_region
    _
  $region17: #{mlp_forward.1} parent=0 // pred_fallthru
    _
  // Predicated region
  $region18: #{mlp_forward.1} parent=0 // pred_check
    _
  $region19: #{mlp_forward.1} parent=0 // pred_check_branch
    %24 = sbr.rel (0) target = $region21
  $region20: #{mlp_forward.1} parent=0 // pred_region
    _
  $region21: #{mlp_forward.1} parent=0 // pred_fallthru
    _
  // Predicated region
  $region22: #{mlp_forward.1} parent=0 // pred_check
    _
  $region23: #{mlp_forward.1} parent=0 // pred_check_branch
    %26 = sbr.rel (0) target = $region25
  $region24: #{mlp_forward.1} parent=0 // pred_region
    _
  $region25: #{mlp_forward.1} parent=0 // pred_fallthru
    _
  // Predicated region
  $region26: #{mlp_forward.1} parent=0 // pred_check
    _
  $region27: #{mlp_forward.1} parent=0 // pred_check_branch
    %28 = sbr.rel (0) target = $region29
  $region28: #{mlp_forward.1} parent=0 // pred_region
    _
  $region29: #{mlp_forward.1} parent=0 // pred_fallthru
    _
  // Predicated region
  $region30: #{mlp_forward.1} parent=0 // pred_check
    _
  $region31: #{mlp_forward.1} parent=0 // pred_check_branch
    %30 = sbr.rel (0) target = $region33
  $region32: #{mlp_forward.1} parent=0 // pred_region
    _
  $region33: #{mlp_forward.1} parent=0 // pred_fallthru
    _
  // Predicated region
  $region34: #{mlp_forward.1} parent=0 // pred_check
    _
  $region35: #{mlp_forward.1} parent=0 // pred_check_branch
    %32 = sbr.rel (0) target = $region37
  $region36: #{mlp_forward.1} parent=0 // pred_region
    _
  $region37: #{mlp_forward.1} parent=0 // pred_fallthru
    _
  // Predicated region
  $region38: #{mlp_forward.1} parent=0 // pred_check
    _
  $region39: #{mlp_forward.1} parent=0 // pred_check_branch
    %34 = sbr.rel (0) target = $region41
  $region40: #{mlp_forward.1} parent=0 // pred_region
    _
  $region41: #{mlp_forward.1} parent=0 // pred_fallthru
    _
  %v35 = vld [vmem:[%s0] sm:$0xff]
  %v36 = vld [vmem:[%s0 + $0x8] sm:$0xff]
  %v37 = vld [vmem:[%s0 + $0x10] sm:$0xff]
  %v38 = vld [vmem:[%s0 + $0x18] sm:$0xff]
  %v39 = vld [vmem:[%s0 + $0x20] sm:$0xff]
  %v40 = vld [vmem:[%s0 + $0x28] sm:$0xff]
  %v41 = vld [vmem:[%s0 + $0x30] sm:$0xff]
  %v42 = vld [vmem:[%s0 + $0x38] sm:$0xff]
  %v43 = vld [vmem:[%s0 + $0x40] sm:$0xff]
  %v44 = vld [vmem:[%s0 + $0x48] sm:$0xff]
  %v45 = vld [vmem:[%s0 + $0x50] sm:$0xff]
  %v46 = vld [vmem:[%s0 + $0x58] sm:$0xff]
  %v47 = vld [vmem:[%s0 + $0x60] sm:$0xff]
  %v48 = vld [vmem:[%s0 + $0x68] sm:$0xff]
  %v49 = vld [vmem:[%s0 + $0x70] sm:$0xff]
  %v50 = vld [vmem:[%s0 + $0x78] sm:$0xff]
  %v51 = vld [vmem:[%s0 + $0x80] sm:$0xff]
  %v52 = vld [vmem:[%s0 + $0x88] sm:$0xff]
  %v53 = vld [vmem:[%s0 + $0x90] sm:$0xff]
  %v54 = vld [vmem:[%s0 + $0x98] sm:$0xff]
  %v55 = vld [vmem:[%s0 + $0xa0] sm:$0xff]
  %v56 = vld [vmem:[%s0 + $0xa8] sm:$0xff]
  %v57 = vld [vmem:[%s0 + $0xb0] sm:$0xff]
  %v58 = vld [vmem:[%s0 + $0xb8] sm:$0xff]
  %v59 = vld [vmem:[%s0 + $0xc0] sm:$0xff]
  %v60 = vld [vmem:[%s0 + $0xc8] sm:$0xff]
  %v61 = vld [vmem:[%s0 + $0xd0] sm:$0xff]
  %v62 = vld [vmem:[%s0 + $0xd8] sm:$0xff]
  %v63 = vld [vmem:[%s0 + $0xe0] sm:$0xff]
  %v64 = vld [vmem:[%s0 + $0xe8] sm:$0xff]
  %v65 = vld [vmem:[%s0 + $0xf0] sm:$0xff]
  %v66 = vld [vmem:[%s0 + $0xf8] sm:$0xff]
  %v67 = vld [vmem:[%s1] sm:$0xff]
  %v68 = vld [vmem:[%s1 + $0x8] sm:$0xff]
  %v69 = vld [vmem:[%s2] sm:$0x1]
  %v71 = vlaneseq
  %v72 = vshrl.u32 %v71, 7
  %v73 = vsub.s32 0, %v72
  %v74 = vrot.slane %v69, %v73
  %vm76 = vcmask 130048
  %v78 = vsel %vm76, %v35, 0
  %v81 = vsel %vm76, %v36, 0
  %v84 = vsel %vm76, %v37, 0
  %v87 = vsel %vm76, %v38, 0
  %v90 = vsel %vm76, %v39, 0
  %v93 = vsel %vm76, %v40, 0
  %v96 = vsel %vm76, %v41, 0
  %v99 = vsel %vm76, %v42, 0
  %v102 = vsel %vm76, %v43, 0
  %v105 = vsel %vm76, %v44, 0
  %v108 = vsel %vm76, %v45, 0
  %v111 = vsel %vm76, %v46, 0
  %v114 = vsel %vm76, %v47, 0
  %v117 = vsel %vm76, %v48, 0
  %v120 = vsel %vm76, %v49, 0
  %v123 = vsel %vm76, %v50, 0
  %v126 = vsel %vm76, %v51, 0
  %v129 = vsel %vm76, %v52, 0
  %v132 = vsel %vm76, %v53, 0
  %v135 = vsel %vm76, %v54, 0
  %v138 = vsel %vm76, %v55, 0
  %v141 = vsel %vm76, %v56, 0
  %v144 = vsel %vm76, %v57, 0
  %v147 = vsel %vm76, %v58, 0
  %v150 = vsel %vm76, %v59, 0
  %v153 = vsel %vm76, %v60, 0
  %v156 = vsel %vm76, %v61, 0
  %v159 = vsel %vm76, %v62, 0
  %v162 = vsel %vm76, %v63, 0
  %v165 = vsel %vm76, %v64, 0
  %v168 = vsel %vm76, %v65, 0
  %v171 = vsel %vm76, %v66, 0
  %173 = vmatprep.subr.mxu0 0.0
  %174 = vmatpush1.msra.mxu0 %v67
  %175 = vmatprep.subr.mxu0 0.0
  %176 = vmatpush1.msra.mxu0 %v68
  %177 = vmatprep.subr.mxu0 0.0
  %178 = vmatpush1.msra.mxu0 0.0
  %179 = vmatprep.subr.mxu0 0.0
  %180 = vmatpush1.msra.mxu0 0.0
  %181 = vmatprep.subr.mxu0 0.0
  %182 = vmatpush1.msra.mxu0 0.0
  %183 = vmatprep.subr.mxu0 0.0
  %184 = vmatpush1.msra.mxu0 0.0
  %185 = vmatprep.subr.mxu0 0.0
  %186 = vmatpush1.msra.mxu0 0.0
  %187 = vmatprep.subr.mxu0 0.0
  %188 = vmatpush1.msra.mxu0 0.0
  %189 = vmatprep.subr.mxu0 0.0
  %190 = vmatpush1.msra.mxu0 0.0
  %191 = vmatprep.subr.mxu0 0.0
  %192 = vmatpush1.msra.mxu0 0.0
  %193 = vmatprep.subr.mxu0 0.0
  %194 = vmatpush1.msra.mxu0 0.0
  %195 = vmatprep.subr.mxu0 0.0
  %196 = vmatpush1.msra.mxu0 0.0
  %197 = vmatprep.subr.mxu0 0.0
  %198 = vmatpush1.msra.mxu0 0.0
  %199 = vmatprep.subr.mxu0 0.0
  %200 = vmatpush1.msra.mxu0 0.0
  %201 = vmatprep.subr.mxu0 0.0
  %202 = vmatpush1.msra.mxu0 0.0
  %203 = vmatprep.subr.mxu0 0.0
  %204 = vmatpush1.msra.mxu0 0.0
  %205 = vmatprep.subr.mxu0 0.0
  %206 = vmatpush1.msra.mxu0 0.0
  %207 = vmatprep.subr.mxu0 0.0
  %208 = vmatpush1.msra.mxu0 0.0
  %209 = vmatprep.subr.mxu0 0.0
  %210 = vmatpush1.msra.mxu0 0.0
  %211 = vmatprep.subr.mxu0 0.0
  %212 = vmatpush1.msra.mxu0 0.0
  %213 = vmatprep.subr.mxu0 0.0
  %214 = vmatpush1.msra.mxu0 0.0
  %215 = vmatprep.subr.mxu0 0.0
  %216 = vmatpush1.msra.mxu0 0.0
  %217 = vmatprep.subr.mxu0 0.0
  %218 = vmatpush1.msra.mxu0 0.0
  %219 = vmatprep.subr.mxu0 0.0
  %220 = vmatpush1.msra.mxu0 0.0
  %221 = vmatprep.subr.mxu0 0.0
  %222 = vmatpush1.msra.mxu0 0.0
  %223 = vmatprep.subr.mxu0 0.0
  %224 = vmatpush1.msra.mxu0 0.0
  %225 = vmatprep.subr.mxu0 0.0
  %226 = vmatpush1.msra.mxu0 0.0
  %227 = vmatprep.subr.mxu0 0.0
  %228 = vmatpush1.msra.mxu0 0.0
  %229 = vmatprep.subr.mxu0 0.0
  %230 = vmatpush1.msra.mxu0 0.0
  %231 = vmatprep.subr.mxu0 0.0
  %232 = vmatpush1.msra.mxu0 0.0
  %233 = vmatprep.subr.mxu0 0.0
  %234 = vmatpush1.msra.mxu0 0.0
  %235 = vmatprep.subr.mxu0 0.0
  %236 = vmatpush1.msra.mxu0 0.0
  %237 = vmatprep.mubr.f32.mxu0 0.0
  %238 = vmatmul.mubr.f32.gmra.mrb[0].mxu0 %v78
  %v239 = vpop.f32.mrb[0].mxu0
  %v240 = vadd.f32 %v74, %v239
  %v241 = vpop.f32.mrb[0].mxu0
  %242 = vmatprep.mubr.f32.mxu0 0.0
  %243 = vmatmul.mubr.f32.gmra.mrb[0].mxu0 %v81
  %v244 = vpop.f32.mrb[0].mxu0
  %v245 = vadd.f32 %v74, %v244
  %v246 = vpop.f32.mrb[0].mxu0
  %247 = vmatprep.mubr.f32.mxu0 0.0
  %248 = vmatmul.mubr.f32.gmra.mrb[0].mxu0 %v84
  %v249 = vpop.f32.mrb[0].mxu0
  %v250 = vadd.f32 %v74, %v249
  %v251 = vpop.f32.mrb[0].mxu0
  %252 = vmatprep.mubr.f32.mxu0 0.0
  %253 = vmatmul.mubr.f32.gmra.mrb[0].mxu0 %v87
  %v254 = vpop.f32.mrb[0].mxu0
  %v255 = vadd.f32 %v74, %v254
  %v256 = vpop.f32.mrb[0].mxu0
  %257 = vmatprep.mubr.f32.mxu0 0.0
  %258 = vmatmul.mubr.f32.gmra.mrb[0].mxu0 %v90
  %v259 = vpop.f32.mrb[0].mxu0
  %v260 = vadd.f32 %v74, %v259
  %v261 = vpop.f32.mrb[0].mxu0
  %262 = vmatprep.mubr.f32.mxu0 0.0
  %263 = vmatmul.mubr.f32.gmra.mrb[0].mxu0 %v93
  %v264 = vpop.f32.mrb[0].mxu0
  %v265 = vadd.f32 %v74, %v264
  %v266 = vpop.f32.mrb[0].mxu0
  %267 = vmatprep.mubr.f32.mxu0 0.0
  %268 = vmatmul.mubr.f32.gmra.mrb[0].mxu0 %v96
  %v269 = vpop.f32.mrb[0].mxu0
  %v270 = vadd.f32 %v74, %v269
  %v271 = vpop.f32.mrb[0].mxu0
  %272 = vmatprep.mubr.f32.mxu0 0.0
  %273 = vmatmul.mubr.f32.gmra.mrb[0].mxu0 %v99
  %v274 = vpop.f32.mrb[0].mxu0
  %v275 = vadd.f32 %v74, %v274
  %v276 = vpop.f32.mrb[0].mxu0
  %277 = vmatprep.mubr.f32.mxu0 0.0
  %278 = vmatmul.mubr.f32.gmra.mrb[0].mxu0 %v102
  %v279 = vpop.f32.mrb[0].mxu0
  %v280 = vadd.f32 %v74, %v279
  %v281 = vpop.f32.mrb[0].mxu0
  %282 = vmatprep.mubr.f32.mxu0 0.0
  %283 = vmatmul.mubr.f32.gmra.mrb[0].mxu0 %v105
  %v284 = vpop.f32.mrb[0].mxu0
  %v285 = vadd.f32 %v74, %v284
  %v286 = vpop.f32.mrb[0].mxu0
  %287 = vmatprep.mubr.f32.mxu0 0.0
  %288 = vmatmul.mubr.f32.gmra.mrb[0].mxu0 %v108
  %v289 = vpop.f32.mrb[0].mxu0
  %v290 = vadd.f32 %v74, %v289
  %v291 = vpop.f32.mrb[0].mxu0
  %292 = vmatprep.mubr.f32.mxu0 0.0
  %293 = vmatmul.mubr.f32.gmra.mrb[0].mxu0 %v111
  %v294 = vpop.f32.mrb[0].mxu0
  %v295 = vadd.f32 %v74, %v294
  %v296 = vpop.f32.mrb[0].mxu0
  %297 = vmatprep.mubr.f32.mxu0 0.0
  %298 = vmatmul.mubr.f32.gmra.mrb[0].mxu0 %v114
  %v299 = vpop.f32.mrb[0].mxu0
  %v300 = vadd.f32 %v74, %v299
  %v301 = vpop.f32.mrb[0].mxu0
  %302 = vmatprep.mubr.f32.mxu0 0.0
  %303 = vmatmul.mubr.f32.gmra.mrb[0].mxu0 %v117
  %v304 = vpop.f32.mrb[0].mxu0
  %v305 = vadd.f32 %v74, %v304
  %v306 = vpop.f32.mrb[0].mxu0
  %307 = vmatprep.mubr.f32.mxu0 0.0
  %308 = vmatmul.mubr.f32.gmra.mrb[0].mxu0 %v120
  %v309 = vpop.f32.mrb[0].mxu0
  %v310 = vadd.f32 %v74, %v309
  %v311 = vpop.f32.mrb[0].mxu0
  %312 = vmatprep.mubr.f32.mxu0 0.0
  %313 = vmatmul.mubr.f32.gmra.mrb[0].mxu0 %v123
  %v314 = vpop.f32.mrb[0].mxu0
  %v315 = vadd.f32 %v74, %v314
  %v316 = vpop.f32.mrb[0].mxu0
  %317 = vmatprep.mubr.f32.mxu0 0.0
  %318 = vmatmul.mubr.f32.gmra.mrb[0].mxu0 %v126
  %v319 = vpop.f32.mrb[0].mxu0
  %v320 = vadd.f32 %v74, %v319
  %v321 = vpop.f32.mrb[0].mxu0
  %322 = vmatprep.mubr.f32.mxu0 0.0
  %323 = vmatmul.mubr.f32.gmra.mrb[0].mxu0 %v129
  %v324 = vpop.f32.mrb[0].mxu0
  %v325 = vadd.f32 %v74, %v324
  %v326 = vpop.f32.mrb[0].mxu0
  %327 = vmatprep.mubr.f32.mxu0 0.0
  %328 = vmatmul.mubr.f32.gmra.mrb[0].mxu0 %v132
  %v329 = vpop.f32.mrb[0].mxu0
  %v330 = vadd.f32 %v74, %v329
  %v331 = vpop.f32.mrb[0].mxu0
  %332 = vmatprep.mubr.f32.mxu0 0.0
  %333 = vmatmul.mubr.f32.gmra.mrb[0].mxu0 %v135
  %v334 = vpop.f32.mrb[0].mxu0
  %v335 = vadd.f32 %v74, %v334
  %v336 = vpop.f32.mrb[0].mxu0
  %337 = vmatprep.mubr.f32.mxu0 0.0
  %338 = vmatmul.mubr.f32.gmra.mrb[0].mxu0 %v138
  %v339 = vpop.f32.mrb[0].mxu0
  %v340 = vadd.f32 %v74, %v339
  %v341 = vpop.f32.mrb[0].mxu0
  %342 = vmatprep.mubr.f32.mxu0 0.0
  %343 = vmatmul.mubr.f32.gmra.mrb[0].mxu0 %v141
  %v344 = vpop.f32.mrb[0].mxu0
  %v345 = vadd.f32 %v74, %v344
  %v346 = vpop.f32.mrb[0].mxu0
  %347 = vmatprep.mubr.f32.mxu0 0.0
  %348 = vmatmul.mubr.f32.gmra.mrb[0].mxu0 %v144
  %v349 = vpop.f32.mrb[0].mxu0
  %v350 = vadd.f32 %v74, %v349
  %v351 = vpop.f32.mrb[0].mxu0
  %352 = vmatprep.mubr.f32.mxu0 0.0
  %353 = vmatmul.mubr.f32.gmra.mrb[0].mxu0 %v147
  %v354 = vpop.f32.mrb[0].mxu0
  %v355 = vadd.f32 %v74, %v354
  %v356 = vpop.f32.mrb[0].mxu0
  %357 = vmatprep.mubr.f32.mxu0 0.0
  %358 = vmatmul.mubr.f32.gmra.mrb[0].mxu0 %v150
  %v359 = vpop.f32.mrb[0].mxu0
  %v360 = vadd.f32 %v74, %v359
  %v361 = vpop.f32.mrb[0].mxu0
  %362 = vmatprep.mubr.f32.mxu0 0.0
  %363 = vmatmul.mubr.f32.gmra.mrb[0].mxu0 %v153
  %v364 = vpop.f32.mrb[0].mxu0
  %v365 = vadd.f32 %v74, %v364
  %v366 = vpop.f32.mrb[0].mxu0
  %367 = vmatprep.mubr.f32.mxu0 0.0
  %368 = vmatmul.mubr.f32.gmra.mrb[0].mxu0 %v156
  %v369 = vpop.f32.mrb[0].mxu0
  %v370 = vadd.f32 %v74, %v369
  %v371 = vpop.f32.mrb[0].mxu0
  %372 = vmatprep.mubr.f32.mxu0 0.0
  %373 = vmatmul.mubr.f32.gmra.mrb[0].mxu0 %v159
  %v374 = vpop.f32.mrb[0].mxu0
  %v375 = vadd.f32 %v74, %v374
  %v376 = vpop.f32.mrb[0].mxu0
  %377 = vmatprep.mubr.f32.mxu0 0.0
  %378 = vmatmul.mubr.f32.gmra.mrb[0].mxu0 %v162
  %v379 = vpop.f32.mrb[0].mxu0
  %v380 = vadd.f32 %v74, %v379
  %v381 = vpop.f32.mrb[0].mxu0
  %382 = vmatprep.mubr.f32.mxu0 0.0
  %383 = vmatmul.mubr.f32.gmra.mrb[0].mxu0 %v165
  %v384 = vpop.f32.mrb[0].mxu0
  %v385 = vadd.f32 %v74, %v384
  %v386 = vpop.f32.mrb[0].mxu0
  %387 = vmatprep.mubr.f32.mxu0 0.0
  %388 = vmatmul.mubr.f32.gmra.mrb[0].mxu0 %v168
  %v389 = vpop.f32.mrb[0].mxu0
  %v390 = vadd.f32 %v74, %v389
  %v391 = vpop.f32.mrb[0].mxu0
  %392 = vmatprep.mubr.f32.mxu0 0.0
  %393 = vmatmul.mubr.f32.gmra.mrb[0].mxu0 %v171
  %v394 = vpop.f32.mrb[0].mxu0
  %v395 = vadd.f32 %v74, %v394
  %v396 = vpop.f32.mrb[0].mxu0
  %397 = vdwg.mxu0
  %v398 = vmax.f32 %v240, 0.0
  %v399 = vmax.f32 %v245, 0.0
  %v400 = vmax.f32 %v250, 0.0
  %v401 = vmax.f32 %v255, 0.0
  %v402 = vmax.f32 %v260, 0.0
  %v403 = vmax.f32 %v265, 0.0
  %v404 = vmax.f32 %v270, 0.0
  %v405 = vmax.f32 %v275, 0.0
  %v406 = vmax.f32 %v280, 0.0
  %v407 = vmax.f32 %v285, 0.0
  %v408 = vmax.f32 %v290, 0.0
  %v409 = vmax.f32 %v295, 0.0
  %v410 = vmax.f32 %v300, 0.0
  %v411 = vmax.f32 %v305, 0.0
  %v412 = vmax.f32 %v310, 0.0
  %v413 = vmax.f32 %v315, 0.0
  %v414 = vmax.f32 %v320, 0.0
  %v415 = vmax.f32 %v325, 0.0
  %v416 = vmax.f32 %v330, 0.0
  %v417 = vmax.f32 %v335, 0.0
  %v418 = vmax.f32 %v340, 0.0
  %v419 = vmax.f32 %v345, 0.0
  %v420 = vmax.f32 %v350, 0.0
  %v421 = vmax.f32 %v355, 0.0
  %v422 = vmax.f32 %v360, 0.0
  %v423 = vmax.f32 %v365, 0.0
  %v424 = vmax.f32 %v370, 0.0
  %v425 = vmax.f32 %v375, 0.0
  %v426 = vmax.f32 %v380, 0.0
  %v427 = vmax.f32 %v385, 0.0
  %v428 = vmax.f32 %v390, 0.0
  %v429 = vmax.f32 %v395, 0.0
  %v430 = vld [vmem:[%s3] sm:$0xff]
  %v431 = vld [vmem:[%s3 + $0x8] sm:$0xff]
  %v432 = vld [vmem:[%s3 + $0x10] sm:$0xff]
  %v433 = vld [vmem:[%s3 + $0x18] sm:$0xff]
  %v434 = vld [vmem:[%s4] sm:$0x1]
  %v436 = vlaneseq
  %v437 = vshrl.u32 %v436, 7
  %v438 = vsub.s32 0, %v437
  %v439 = vrot.slane %v434, %v438
  %vm441 = vcmask 261120
  %v443 = vsel %vm441, %v398, 0
  %v446 = vsel %vm441, %v399, 0
  %v449 = vsel %vm441, %v400, 0
  %v452 = vsel %vm441, %v401, 0
  %v455 = vsel %vm441, %v402, 0
  %v458 = vsel %vm441, %v403, 0
  %v461 = vsel %vm441, %v404, 0
  %v464 = vsel %vm441, %v405, 0
  %v467 = vsel %vm441, %v406, 0
  %v470 = vsel %vm441, %v407, 0
  %v473 = vsel %vm441, %v408, 0
  %v476 = vsel %vm441, %v409, 0
  %v479 = vsel %vm441, %v410, 0
  %v482 = vsel %vm441, %v411, 0
  %v485 = vsel %vm441, %v412, 0
  %v488 = vsel %vm441, %v413, 0
  %v491 = vsel %vm441, %v414, 0
  %v494 = vsel %vm441, %v415, 0
  %v497 = vsel %vm441, %v416, 0
  %v500 = vsel %vm441, %v417, 0
  %v503 = vsel %vm441, %v418, 0
  %v506 = vsel %vm441, %v419, 0
  %v509 = vsel %vm441, %v420, 0
  %v512 = vsel %vm441, %v421, 0
  %v515 = vsel %vm441, %v422, 0
  %v518 = vsel %vm441, %v423, 0
  %v521 = vsel %vm441, %v424, 0
  %v524 = vsel %vm441, %v425, 0
  %v527 = vsel %vm441, %v426, 0
  %v530 = vsel %vm441, %v427, 0
  %v533 = vsel %vm441, %v428, 0
  %v536 = vsel %vm441, %v429, 0
  %538 = vmatprep.subr.mxu0 0.0
  %539 = vmatpush1.msra.mxu0 %v430
  %540 = vmatprep.subr.mxu0 0.0
  %541 = vmatpush1.msra.mxu0 %v431
  %542 = vmatprep.subr.mxu0 0.0
  %543 = vmatpush1.msra.mxu0 %v432
  %544 = vmatprep.subr.mxu0 0.0
  %545 = vmatpush1.msra.mxu0 %v433
  %546 = vmatprep.subr.mxu0 0.0
  %547 = vmatpush1.msra.mxu0 0.0
  %548 = vmatprep.subr.mxu0 0.0
  %549 = vmatpush1.msra.mxu0 0.0
  %550 = vmatprep.subr.mxu0 0.0
  %551 = vmatpush1.msra.mxu0 0.0
  %552 = vmatprep.subr.mxu0 0.0
  %553 = vmatpush1.msra.mxu0 0.0
  %554 = vmatprep.subr.mxu0 0.0
  %555 = vmatpush1.msra.mxu0 0.0
  %556 = vmatprep.subr.mxu0 0.0
  %557 = vmatpush1.msra.mxu0 0.0
  %558 = vmatprep.subr.mxu0 0.0
  %559 = vmatpush1.msra.mxu0 0.0
  %560 = vmatprep.subr.mxu0 0.0
  %561 = vmatpush1.msra.mxu0 0.0
  %562 = vmatprep.subr.mxu0 0.0
  %563 = vmatpush1.msra.mxu0 0.0
  %564 = vmatprep.subr.mxu0 0.0
  %565 = vmatpush1.msra.mxu0 0.0
  %566 = vmatprep.subr.mxu0 0.0
  %567 = vmatpush1.msra.mxu0 0.0
  %568 = vmatprep.subr.mxu0 0.0
  %569 = vmatpush1.msra.mxu0 0.0
  %570 = vmatprep.subr.mxu0 0.0
  %571 = vmatpush1.msra.mxu0 0.0
  %572 = vmatprep.subr.mxu0 0.0
  %573 = vmatpush1.msra.mxu0 0.0
  %574 = vmatprep.subr.mxu0 0.0
  %575 = vmatpush1.msra.mxu0 0.0
  %576 = vmatprep.subr.mxu0 0.0
  %577 = vmatpush1.msra.mxu0 0.0
  %578 = vmatprep.subr.mxu0 0.0
  %579 = vmatpush1.msra.mxu0 0.0
  %580 = vmatprep.subr.mxu0 0.0
  %581 = vmatpush1.msra.mxu0 0.0
  %582 = vmatprep.subr.mxu0 0.0
  %583 = vmatpush1.msra.mxu0 0.0
  %584 = vmatprep.subr.mxu0 0.0
  %585 = vmatpush1.msra.mxu0 0.0
  %586 = vmatprep.subr.mxu0 0.0
  %587 = vmatpush1.msra.mxu0 0.0
  %588 = vmatprep.subr.mxu0 0.0
  %589 = vmatpush1.msra.mxu0 0.0
  %590 = vmatprep.subr.mxu0 0.0
  %591 = vmatpush1.msra.mxu0 0.0
  %592 = vmatprep.subr.mxu0 0.0
  %593 = vmatpush1.msra.mxu0 0.0
  %594 = vmatprep.subr.mxu0 0.0
  %595 = vmatpush1.msra.mxu0 0.0
  %596 = vmatprep.subr.mxu0 0.0
  %597 = vmatpush1.msra.mxu0 0.0
  %598 = vmatprep.subr.mxu0 0.0
  %599 = vmatpush1.msra.mxu0 0.0
  %600 = vmatprep.subr.mxu0 0.0
  %601 = vmatpush1.msra.mxu0 0.0
  %602 = vmatprep.mubr.f32.mxu0 0.0
  %603 = vmatmul.mubr.f32.gmra.mrb[0].mxu0 %v443
  %v604 = vpop.f32.mrb[0].mxu0
  %v605 = vadd.f32 %v439, %v604
  %v606 = vpop.f32.mrb[0].mxu0
  %607 = vmatprep.mubr.f32.mxu0 0.0
  %608 = vmatmul.mubr.f32.gmra.mrb[0].mxu0 %v446
  %v609 = vpop.f32.mrb[0].mxu0
  %v610 = vadd.f32 %v439, %v609
  %v611 = vpop.f32.mrb[0].mxu0
  %612 = vmatprep.mubr.f32.mxu0 0.0
  %613 = vmatmul.mubr.f32.gmra.mrb[0].mxu0 %v449
  %v614 = vpop.f32.mrb[0].mxu0
  %v615 = vadd.f32 %v439, %v614
  %v616 = vpop.f32.mrb[0].mxu0
  %617 = vmatprep.mubr.f32.mxu0 0.0
  %618 = vmatmul.mubr.f32.gmra.mrb[0].mxu0 %v452
  %v619 = vpop.f32.mrb[0].mxu0
  %v620 = vadd.f32 %v439, %v619
  %v621 = vpop.f32.mrb[0].mxu0
  %622 = vmatprep.mubr.f32.mxu0 0.0
  %623 = vmatmul.mubr.f32.gmra.mrb[0].mxu0 %v455
  %v624 = vpop.f32.mrb[0].mxu0
  %v625 = vadd.f32 %v439, %v624
  %v626 = vpop.f32.mrb[0].mxu0
  %627 = vmatprep.mubr.f32.mxu0 0.0
  %628 = vmatmul.mubr.f32.gmra.mrb[0].mxu0 %v458
  %v629 = vpop.f32.mrb[0].mxu0
  %v630 = vadd.f32 %v439, %v629
  %v631 = vpop.f32.mrb[0].mxu0
  %632 = vmatprep.mubr.f32.mxu0 0.0
  %633 = vmatmul.mubr.f32.gmra.mrb[0].mxu0 %v461
  %v634 = vpop.f32.mrb[0].mxu0
  %v635 = vadd.f32 %v439, %v634
  %v636 = vpop.f32.mrb[0].mxu0
  %637 = vmatprep.mubr.f32.mxu0 0.0
  %638 = vmatmul.mubr.f32.gmra.mrb[0].mxu0 %v464
  %v639 = vpop.f32.mrb[0].mxu0
  %v640 = vadd.f32 %v439, %v639
  %v641 = vpop.f32.mrb[0].mxu0
  %642 = vmatprep.mubr.f32.mxu0 0.0
  %643 = vmatmul.mubr.f32.gmra.mrb[0].mxu0 %v467
  %v644 = vpop.f32.mrb[0].mxu0
  %v645 = vadd.f32 %v439, %v644
  %v646 = vpop.f32.mrb[0].mxu0
  %647 = vmatprep.mubr.f32.mxu0 0.0
  %648 = vmatmul.mubr.f32.gmra.mrb[0].mxu0 %v470
  %v649 = vpop.f32.mrb[0].mxu0
  %v650 = vadd.f32 %v439, %v649
  %v651 = vpop.f32.mrb[0].mxu0
  %652 = vmatprep.mubr.f32.mxu0 0.0
  %653 = vmatmul.mubr.f32.gmra.mrb[0].mxu0 %v473
  %v654 = vpop.f32.mrb[0].mxu0
  %v655 = vadd.f32 %v439, %v654
  %v656 = vpop.f32.mrb[0].mxu0
  %657 = vmatprep.mubr.f32.mxu0 0.0
  %658 = vmatmul.mubr.f32.gmra.mrb[0].mxu0 %v476
  %v659 = vpop.f32.mrb[0].mxu0
  %v660 = vadd.f32 %v439, %v659
  %v661 = vpop.f32.mrb[0].mxu0
  %662 = vmatprep.mubr.f32.mxu0 0.0
  %663 = vmatmul.mubr.f32.gmra.mrb[0].mxu0 %v479
  %v664 = vpop.f32.mrb[0].mxu0
  %v665 = vadd.f32 %v439, %v664
  %v666 = vpop.f32.mrb[0].mxu0
  %667 = vmatprep.mubr.f32.mxu0 0.0
  %668 = vmatmul.mubr.f32.gmra.mrb[0].mxu0 %v482
  %v669 = vpop.f32.mrb[0].mxu0
  %v670 = vadd.f32 %v439, %v669
  %v671 = vpop.f32.mrb[0].mxu0
  %672 = vmatprep.mubr.f32.mxu0 0.0
  %673 = vmatmul.mubr.f32.gmra.mrb[0].mxu0 %v485
  %v674 = vpop.f32.mrb[0].mxu0
  %v675 = vadd.f32 %v439, %v674
  %v676 = vpop.f32.mrb[0].mxu0
  %677 = vmatprep.mubr.f32.mxu0 0.0
  %678 = vmatmul.mubr.f32.gmra.mrb[0].mxu0 %v488
  %v679 = vpop.f32.mrb[0].mxu0
  %v680 = vadd.f32 %v439, %v679
  %v681 = vpop.f32.mrb[0].mxu0
  %682 = vmatprep.mubr.f32.mxu0 0.0
  %683 = vmatmul.mubr.f32.gmra.mrb[0].mxu0 %v491
  %v684 = vpop.f32.mrb[0].mxu0
  %v685 = vadd.f32 %v439, %v684
  %v686 = vpop.f32.mrb[0].mxu0
  %687 = vmatprep.mubr.f32.mxu0 0.0
  %688 = vmatmul.mubr.f32.gmra.mrb[0].mxu0 %v494
  %v689 = vpop.f32.mrb[0].mxu0
  %v690 = vadd.f32 %v439, %v689
  %v691 = vpop.f32.mrb[0].mxu0
  %692 = vmatprep.mubr.f32.mxu0 0.0
  %693 = vmatmul.mubr.f32.gmra.mrb[0].mxu0 %v497
  %v694 = vpop.f32.mrb[0].mxu0
  %v695 = vadd.f32 %v439, %v694
  %v696 = vpop.f32.mrb[0].mxu0
  %697 = vmatprep.mubr.f32.mxu0 0.0
  %698 = vmatmul.mubr.f32.gmra.mrb[0].mxu0 %v500
  %v699 = vpop.f32.mrb[0].mxu0
  %v700 = vadd.f32 %v439, %v699
  %v701 = vpop.f32.mrb[0].mxu0
  %702 = vmatprep.mubr.f32.mxu0 0.0
  %703 = vmatmul.mubr.f32.gmra.mrb[0].mxu0 %v503
  %v704 = vpop.f32.mrb[0].mxu0
  %v705 = vadd.f32 %v439, %v704
  %v706 = vpop.f32.mrb[0].mxu0
  %707 = vmatprep.mubr.f32.mxu0 0.0
  %708 = vmatmul.mubr.f32.gmra.mrb[0].mxu0 %v506
  %v709 = vpop.f32.mrb[0].mxu0
  %v710 = vadd.f32 %v439, %v709
  %v711 = vpop.f32.mrb[0].mxu0
  %712 = vmatprep.mubr.f32.mxu0 0.0
  %713 = vmatmul.mubr.f32.gmra.mrb[0].mxu0 %v509
  %v714 = vpop.f32.mrb[0].mxu0
  %v715 = vadd.f32 %v439, %v714
  %v716 = vpop.f32.mrb[0].mxu0
  %717 = vmatprep.mubr.f32.mxu0 0.0
  %718 = vmatmul.mubr.f32.gmra.mrb[0].mxu0 %v512
  %v719 = vpop.f32.mrb[0].mxu0
  %v720 = vadd.f32 %v439, %v719
  %v721 = vpop.f32.mrb[0].mxu0
  %722 = vmatprep.mubr.f32.mxu0 0.0
  %723 = vmatmul.mubr.f32.gmra.mrb[0].mxu0 %v515
  %v724 = vpop.f32.mrb[0].mxu0
  %v725 = vadd.f32 %v439, %v724
  %v726 = vpop.f32.mrb[0].mxu0
  %727 = vmatprep.mubr.f32.mxu0 0.0
  %728 = vmatmul.mubr.f32.gmra.mrb[0].mxu0 %v518
  %v729 = vpop.f32.mrb[0].mxu0
  %v730 = vadd.f32 %v439, %v729
  %v731 = vpop.f32.mrb[0].mxu0
  %732 = vmatprep.mubr.f32.mxu0 0.0
  %733 = vmatmul.mubr.f32.gmra.mrb[0].mxu0 %v521
  %v734 = vpop.f32.mrb[0].mxu0
  %v735 = vadd.f32 %v439, %v734
  %v736 = vpop.f32.mrb[0].mxu0
  %737 = vmatprep.mubr.f32.mxu0 0.0
  %738 = vmatmul.mubr.f32.gmra.mrb[0].mxu0 %v524
  %v739 = vpop.f32.mrb[0].mxu0
  %v740 = vadd.f32 %v439, %v739
  %v741 = vpop.f32.mrb[0].mxu0
  %742 = vmatprep.mubr.f32.mxu0 0.0
  %743 = vmatmul.mubr.f32.gmra.mrb[0].mxu0 %v527
  %v744 = vpop.f32.mrb[0].mxu0
  %v745 = vadd.f32 %v439, %v744
  %v746 = vpop.f32.mrb[0].mxu0
  %747 = vmatprep.mubr.f32.mxu0 0.0
  %748 = vmatmul.mubr.f32.gmra.mrb[0].mxu0 %v530
  %v749 = vpop.f32.mrb[0].mxu0
  %v750 = vadd.f32 %v439, %v749
  %v751 = vpop.f32.mrb[0].mxu0
  %752 = vmatprep.mubr.f32.mxu0 0.0
  %753 = vmatmul.mubr.f32.gmra.mrb[0].mxu0 %v533
  %v754 = vpop.f32.mrb[0].mxu0
  %v755 = vadd.f32 %v439, %v754
  %v756 = vpop.f32.mrb[0].mxu0
  %757 = vmatprep.mubr.f32.mxu0 0.0
  %758 = vmatmul.mubr.f32.gmra.mrb[0].mxu0 %v536
  %v759 = vpop.f32.mrb[0].mxu0
  %v760 = vadd.f32 %v439, %v759
  %v761 = vpop.f32.mrb[0].mxu0
  %762 = vdwg.mxu0
  %v763 = vmax.f32 %v605, 0.0
  %v764 = vmax.f32 %v610, 0.0
  %v765 = vmax.f32 %v615, 0.0
  %v766 = vmax.f32 %v620, 0.0
  %v767 = vmax.f32 %v625, 0.0
  %v768 = vmax.f32 %v630, 0.0
  %v769 = vmax.f32 %v635, 0.0
  %v770 = vmax.f32 %v640, 0.0
  %v771 = vmax.f32 %v645, 0.0
  %v772 = vmax.f32 %v650, 0.0
  %v773 = vmax.f32 %v655, 0.0
  %v774 = vmax.f32 %v660, 0.0
  %v775 = vmax.f32 %v665, 0.0
  %v776 = vmax.f32 %v670, 0.0
  %v777 = vmax.f32 %v675, 0.0
  %v778 = vmax.f32 %v680, 0.0
  %v779 = vmax.f32 %v685, 0.0
  %v780 = vmax.f32 %v690, 0.0
  %v781 = vmax.f32 %v695, 0.0
  %v782 = vmax.f32 %v700, 0.0
  %v783 = vmax.f32 %v705, 0.0
  %v784 = vmax.f32 %v710, 0.0
  %v785 = vmax.f32 %v715, 0.0
  %v786 = vmax.f32 %v720, 0.0
  %v787 = vmax.f32 %v725, 0.0
  %v788 = vmax.f32 %v730, 0.0
  %v789 = vmax.f32 %v735, 0.0
  %v790 = vmax.f32 %v740, 0.0
  %v791 = vmax.f32 %v745, 0.0
  %v792 = vmax.f32 %v750, 0.0
  %v793 = vmax.f32 %v755, 0.0
  %v794 = vmax.f32 %v760, 0.0
  %v795 = vld [vmem:[%s5] sm:$0xff]
  %v796 = vld [vmem:[%s5 + $0x8] sm:$0xff]
  %v797 = vld [vmem:[%s5 + $0x10] sm:$0xff]
  %v798 = vld [vmem:[%s5 + $0x18] sm:$0xff]
  %v799 = vld [vmem:[%s6] sm:$0x1]
  %v801 = vlaneseq
  %v802 = vshrl.u32 %v801, 7
  %v803 = vsub.s32 0, %v802
  %v804 = vrot.slane %v799, %v803
  %v807 = vsel %vm441, %v763, 0
  %v810 = vsel %vm441, %v764, 0
  %v813 = vsel %vm441, %v765, 0
  %v816 = vsel %vm441, %v766, 0
  %v819 = vsel %vm441, %v767, 0
  %v822 = vsel %vm441, %v768, 0
  %v825 = vsel %vm441, %v769, 0
  %v828 = vsel %vm441, %v770, 0
  %v831 = vsel %vm441, %v771, 0
  %v834 = vsel %vm441, %v772, 0
  %v837 = vsel %vm441, %v773, 0
  %v840 = vsel %vm441, %v774, 0
  %v843 = vsel %vm441, %v775, 0
  %v846 = vsel %vm441, %v776, 0
  %v849 = vsel %vm441, %v777, 0
  %v852 = vsel %vm441, %v778, 0
  %v855 = vsel %vm441, %v779, 0
  %v858 = vsel %vm441, %v780, 0
  %v861 = vsel %vm441, %v781, 0
  %v864 = vsel %vm441, %v782, 0
  %v867 = vsel %vm441, %v783, 0
  %v870 = vsel %vm441, %v784, 0
  %v873 = vsel %vm441, %v785, 0
  %v876 = vsel %vm441, %v786, 0
  %v879 = vsel %vm441, %v787, 0
  %v882 = vsel %vm441, %v788, 0
  %v885 = vsel %vm441, %v789, 0
  %v888 = vsel %vm441, %v790, 0
  %v891 = vsel %vm441, %v791, 0
  %v894 = vsel %vm441, %v792, 0
  %v897 = vsel %vm441, %v793, 0
  %v900 = vsel %vm441, %v794, 0
  %902 = vmatprep.subr.mxu0 0.0
  %903 = vmatpush1.msra.mxu0 %v795
  %904 = vmatprep.subr.mxu0 0.0
  %905 = vmatpush1.msra.mxu0 %v796
  %906 = vmatprep.subr.mxu0 0.0
  %907 = vmatpush1.msra.mxu0 %v797
  %908 = vmatprep.subr.mxu0 0.0
  %909 = vmatpush1.msra.mxu0 %v798
  %910 = vmatprep.subr.mxu0 0.0
  %911 = vmatpush1.msra.mxu0 0.0
  %912 = vmatprep.subr.mxu0 0.0
  %913 = vmatpush1.msra.mxu0 0.0
  %914 = vmatprep.subr.mxu0 0.0
  %915 = vmatpush1.msra.mxu0 0.0
  %916 = vmatprep.subr.mxu0 0.0
  %917 = vmatpush1.msra.mxu0 0.0
  %918 = vmatprep.subr.mxu0 0.0
  %919 = vmatpush1.msra.mxu0 0.0
  %920 = vmatprep.subr.mxu0 0.0
  %921 = vmatpush1.msra.mxu0 0.0
  %922 = vmatprep.subr.mxu0 0.0
  %923 = vmatpush1.msra.mxu0 0.0
  %924 = vmatprep.subr.mxu0 0.0
  %925 = vmatpush1.msra.mxu0 0.0
  %926 = vmatprep.subr.mxu0 0.0
  %927 = vmatpush1.msra.mxu0 0.0
  %928 = vmatprep.subr.mxu0 0.0
  %929 = vmatpush1.msra.mxu0 0.0
  %930 = vmatprep.subr.mxu0 0.0
  %931 = vmatpush1.msra.mxu0 0.0
  %932 = vmatprep.subr.mxu0 0.0
  %933 = vmatpush1.msra.mxu0 0.0
  %934 = vmatprep.subr.mxu0 0.0
  %935 = vmatpush1.msra.mxu0 0.0
  %936 = vmatprep.subr.mxu0 0.0
  %937 = vmatpush1.msra.mxu0 0.0
  %938 = vmatprep.subr.mxu0 0.0
  %939 = vmatpush1.msra.mxu0 0.0
  %940 = vmatprep.subr.mxu0 0.0
  %941 = vmatpush1.msra.mxu0 0.0
  %942 = vmatprep.subr.mxu0 0.0
  %943 = vmatpush1.msra.mxu0 0.0
  %944 = vmatprep.subr.mxu0 0.0
  %945 = vmatpush1.msra.mxu0 0.0
  %946 = vmatprep.subr.mxu0 0.0
  %947 = vmatpush1.msra.mxu0 0.0
  %948 = vmatprep.subr.mxu0 0.0
  %949 = vmatpush1.msra.mxu0 0.0
  %950 = vmatprep.subr.mxu0 0.0
  %951 = vmatpush1.msra.mxu0 0.0
  %952 = vmatprep.subr.mxu0 0.0
  %953 = vmatpush1.msra.mxu0 0.0
  %954 = vmatprep.subr.mxu0 0.0
  %955 = vmatpush1.msra.mxu0 0.0
  %956 = vmatprep.subr.mxu0 0.0
  %957 = vmatpush1.msra.mxu0 0.0
  %958 = vmatprep.subr.mxu0 0.0
  %959 = vmatpush1.msra.mxu0 0.0
  %960 = vmatprep.subr.mxu0 0.0
  %961 = vmatpush1.msra.mxu0 0.0
  %962 = vmatprep.subr.mxu0 0.0
  %963 = vmatpush1.msra.mxu0 0.0
  %964 = vmatprep.subr.mxu0 0.0
  %965 = vmatpush1.msra.mxu0 0.0
  %966 = vmatprep.mubr.f32.mxu0 0.0
  %967 = vmatmul.mubr.f32.gmra.mrb[0].mxu0 %v807
  %v968 = vpop.f32.mrb[0].mxu0
  %v969 = vadd.f32 %v804, %v968
  %v970 = vpop.f32.mrb[0].mxu0
  %971 = vmatprep.mubr.f32.mxu0 0.0
  %972 = vmatmul.mubr.f32.gmra.mrb[0].mxu0 %v810
  %v973 = vpop.f32.mrb[0].mxu0
  %v974 = vadd.f32 %v804, %v973
  %v975 = vpop.f32.mrb[0].mxu0
  %976 = vmatprep.mubr.f32.mxu0 0.0
  %977 = vmatmul.mubr.f32.gmra.mrb[0].mxu0 %v813
  %v978 = vpop.f32.mrb[0].mxu0
  %v979 = vadd.f32 %v804, %v978
  %v980 = vpop.f32.mrb[0].mxu0
  %981 = vmatprep.mubr.f32.mxu0 0.0
  %982 = vmatmul.mubr.f32.gmra.mrb[0].mxu0 %v816
  %v983 = vpop.f32.mrb[0].mxu0
  %v984 = vadd.f32 %v804, %v983
  %v985 = vpop.f32.mrb[0].mxu0
  %986 = vmatprep.mubr.f32.mxu0 0.0
  %987 = vmatmul.mubr.f32.gmra.mrb[0].mxu0 %v819
  %v988 = vpop.f32.mrb[0].mxu0
  %v989 = vadd.f32 %v804, %v988
  %v990 = vpop.f32.mrb[0].mxu0
  %991 = vmatprep.mubr.f32.mxu0 0.0
  %992 = vmatmul.mubr.f32.gmra.mrb[0].mxu0 %v822
  %v993 = vpop.f32.mrb[0].mxu0
  %v994 = vadd.f32 %v804, %v993
  %v995 = vpop.f32.mrb[0].mxu0
  %996 = vmatprep.mubr.f32.mxu0 0.0
  %997 = vmatmul.mubr.f32.gmra.mrb[0].mxu0 %v825
  %v998 = vpop.f32.mrb[0].mxu0
  %v999 = vadd.f32 %v804, %v998
  %v1000 = vpop.f32.mrb[0].mxu0
  %1001 = vmatprep.mubr.f32.mxu0 0.0
  %1002 = vmatmul.mubr.f32.gmra.mrb[0].mxu0 %v828
  %v1003 = vpop.f32.mrb[0].mxu0
  %v1004 = vadd.f32 %v804, %v1003
  %v1005 = vpop.f32.mrb[0].mxu0
  %1006 = vmatprep.mubr.f32.mxu0 0.0
  %1007 = vmatmul.mubr.f32.gmra.mrb[0].mxu0 %v831
  %v1008 = vpop.f32.mrb[0].mxu0
  %v1009 = vadd.f32 %v804, %v1008
  %v1010 = vpop.f32.mrb[0].mxu0
  %1011 = vmatprep.mubr.f32.mxu0 0.0
  %1012 = vmatmul.mubr.f32.gmra.mrb[0].mxu0 %v834
  %v1013 = vpop.f32.mrb[0].mxu0
  %v1014 = vadd.f32 %v804, %v1013
  %v1015 = vpop.f32.mrb[0].mxu0
  %1016 = vmatprep.mubr.f32.mxu0 0.0
  %1017 = vmatmul.mubr.f32.gmra.mrb[0].mxu0 %v837
  %v1018 = vpop.f32.mrb[0].mxu0
  %v1019 = vadd.f32 %v804, %v1018
  %v1020 = vpop.f32.mrb[0].mxu0
  %1021 = vmatprep.mubr.f32.mxu0 0.0
  %1022 = vmatmul.mubr.f32.gmra.mrb[0].mxu0 %v840
  %v1023 = vpop.f32.mrb[0].mxu0
  %v1024 = vadd.f32 %v804, %v1023
  %v1025 = vpop.f32.mrb[0].mxu0
  %1026 = vmatprep.mubr.f32.mxu0 0.0
  %1027 = vmatmul.mubr.f32.gmra.mrb[0].mxu0 %v843
  %v1028 = vpop.f32.mrb[0].mxu0
  %v1029 = vadd.f32 %v804, %v1028
  %v1030 = vpop.f32.mrb[0].mxu0
  %1031 = vmatprep.mubr.f32.mxu0 0.0
  %1032 = vmatmul.mubr.f32.gmra.mrb[0].mxu0 %v846
  %v1033 = vpop.f32.mrb[0].mxu0
  %v1034 = vadd.f32 %v804, %v1033
  %v1035 = vpop.f32.mrb[0].mxu0
  %1036 = vmatprep.mubr.f32.mxu0 0.0
  %1037 = vmatmul.mubr.f32.gmra.mrb[0].mxu0 %v849
  %v1038 = vpop.f32.mrb[0].mxu0
  %v1039 = vadd.f32 %v804, %v1038
  %v1040 = vpop.f32.mrb[0].mxu0
  %1041 = vmatprep.mubr.f32.mxu0 0.0
  %1042 = vmatmul.mubr.f32.gmra.mrb[0].mxu0 %v852
  %v1043 = vpop.f32.mrb[0].mxu0
  %v1044 = vadd.f32 %v804, %v1043
  %v1045 = vpop.f32.mrb[0].mxu0
  %1046 = vmatprep.mubr.f32.mxu0 0.0
  %1047 = vmatmul.mubr.f32.gmra.mrb[0].mxu0 %v855
  %v1048 = vpop.f32.mrb[0].mxu0
  %v1049 = vadd.f32 %v804, %v1048
  %v1050 = vpop.f32.mrb[0].mxu0
  %1051 = vmatprep.mubr.f32.mxu0 0.0
  %1052 = vmatmul.mubr.f32.gmra.mrb[0].mxu0 %v858
  %v1053 = vpop.f32.mrb[0].mxu0
  %v1054 = vadd.f32 %v804, %v1053
  %v1055 = vpop.f32.mrb[0].mxu0
  %1056 = vmatprep.mubr.f32.mxu0 0.0
  %1057 = vmatmul.mubr.f32.gmra.mrb[0].mxu0 %v861
  %v1058 = vpop.f32.mrb[0].mxu0
  %v1059 = vadd.f32 %v804, %v1058
  %v1060 = vpop.f32.mrb[0].mxu0
  %1061 = vmatprep.mubr.f32.mxu0 0.0
  %1062 = vmatmul.mubr.f32.gmra.mrb[0].mxu0 %v864
  %v1063 = vpop.f32.mrb[0].mxu0
  %v1064 = vadd.f32 %v804, %v1063
  %v1065 = vpop.f32.mrb[0].mxu0
  %1066 = vmatprep.mubr.f32.mxu0 0.0
  %1067 = vmatmul.mubr.f32.gmra.mrb[0].mxu0 %v867
  %v1068 = vpop.f32.mrb[0].mxu0
  %v1069 = vadd.f32 %v804, %v1068
  %v1070 = vpop.f32.mrb[0].mxu0
  %1071 = vmatprep.mubr.f32.mxu0 0.0
  %1072 = vmatmul.mubr.f32.gmra.mrb[0].mxu0 %v870
  %v1073 = vpop.f32.mrb[0].mxu0
  %v1074 = vadd.f32 %v804, %v1073
  %v1075 = vpop.f32.mrb[0].mxu0
  %1076 = vmatprep.mubr.f32.mxu0 0.0
  %1077 = vmatmul.mubr.f32.gmra.mrb[0].mxu0 %v873
  %v1078 = vpop.f32.mrb[0].mxu0
  %v1079 = vadd.f32 %v804, %v1078
  %v1080 = vpop.f32.mrb[0].mxu0
  %1081 = vmatprep.mubr.f32.mxu0 0.0
  %1082 = vmatmul.mubr.f32.gmra.mrb[0].mxu0 %v876
  %v1083 = vpop.f32.mrb[0].mxu0
  %v1084 = vadd.f32 %v804, %v1083
  %v1085 = vpop.f32.mrb[0].mxu0
  %1086 = vmatprep.mubr.f32.mxu0 0.0
  %1087 = vmatmul.mubr.f32.gmra.mrb[0].mxu0 %v879
  %v1088 = vpop.f32.mrb[0].mxu0
  %v1089 = vadd.f32 %v804, %v1088
  %v1090 = vpop.f32.mrb[0].mxu0
  %1091 = vmatprep.mubr.f32.mxu0 0.0
  %1092 = vmatmul.mubr.f32.gmra.mrb[0].mxu0 %v882
  %v1093 = vpop.f32.mrb[0].mxu0
  %v1094 = vadd.f32 %v804, %v1093
  %v1095 = vpop.f32.mrb[0].mxu0
  %1096 = vmatprep.mubr.f32.mxu0 0.0
  %1097 = vmatmul.mubr.f32.gmra.mrb[0].mxu0 %v885
  %v1098 = vpop.f32.mrb[0].mxu0
  %v1099 = vadd.f32 %v804, %v1098
  %v1100 = vpop.f32.mrb[0].mxu0
  %1101 = vmatprep.mubr.f32.mxu0 0.0
  %1102 = vmatmul.mubr.f32.gmra.mrb[0].mxu0 %v888
  %v1103 = vpop.f32.mrb[0].mxu0
  %v1104 = vadd.f32 %v804, %v1103
  %v1105 = vpop.f32.mrb[0].mxu0
  %1106 = vmatprep.mubr.f32.mxu0 0.0
  %1107 = vmatmul.mubr.f32.gmra.mrb[0].mxu0 %v891
  %v1108 = vpop.f32.mrb[0].mxu0
  %v1109 = vadd.f32 %v804, %v1108
  %v1110 = vpop.f32.mrb[0].mxu0
  %1111 = vmatprep.mubr.f32.mxu0 0.0
  %1112 = vmatmul.mubr.f32.gmra.mrb[0].mxu0 %v894
  %v1113 = vpop.f32.mrb[0].mxu0
  %v1114 = vadd.f32 %v804, %v1113
  %v1115 = vpop.f32.mrb[0].mxu0
  %1116 = vmatprep.mubr.f32.mxu0 0.0
  %1117 = vmatmul.mubr.f32.gmra.mrb[0].mxu0 %v897
  %v1118 = vpop.f32.mrb[0].mxu0
  %v1119 = vadd.f32 %v804, %v1118
  %v1120 = vpop.f32.mrb[0].mxu0
  %1121 = vmatprep.mubr.f32.mxu0 0.0
  %1122 = vmatmul.mubr.f32.gmra.mrb[0].mxu0 %v900
  %v1123 = vpop.f32.mrb[0].mxu0
  %v1124 = vadd.f32 %v804, %v1123
  %v1125 = vpop.f32.mrb[0].mxu0
  %1126 = vdwg.mxu0
  %v1127 = vld [vmem:[%s7] sm:$0xff]
  %v1128 = vld [vmem:[%s7 + $0x8] sm:$0xff]
  %1129 = vmatprep.subr.mxu0 0.0
  %1130 = vmatpush1.msra.mxu0 %v1127
  %1131 = vmatprep.subr.mxu0 0.0
  %1132 = vmatpush1.msra.mxu0 %v1128
  %1133 = vmatprep.subr.mxu0 0.0
  %1134 = vmatpush1.msra.mxu0 0.0
  %1135 = vmatprep.subr.mxu0 0.0
  %1136 = vmatpush1.msra.mxu0 0.0
  %1137 = vmatprep.subr.mxu0 0.0
  %1138 = vmatpush1.msra.mxu0 0.0
  %1139 = vmatprep.subr.mxu0 0.0
  %1140 = vmatpush1.msra.mxu0 0.0
  %1141 = vmatprep.subr.mxu0 0.0
  %1142 = vmatpush1.msra.mxu0 0.0
  %1143 = vmatprep.subr.mxu0 0.0
  %1144 = vmatpush1.msra.mxu0 0.0
  %1145 = vmatprep.subr.mxu0 0.0
  %1146 = vmatpush1.msra.mxu0 0.0
  %1147 = vmatprep.subr.mxu0 0.0
  %1148 = vmatpush1.msra.mxu0 0.0
  %1149 = vmatprep.subr.mxu0 0.0
  %1150 = vmatpush1.msra.mxu0 0.0
  %1151 = vmatprep.subr.mxu0 0.0
  %1152 = vmatpush1.msra.mxu0 0.0
  %1153 = vmatprep.subr.mxu0 0.0
  %1154 = vmatpush1.msra.mxu0 0.0
  %1155 = vmatprep.subr.mxu0 0.0
  %1156 = vmatpush1.msra.mxu0 0.0
  %1157 = vmatprep.subr.mxu0 0.0
  %1158 = vmatpush1.msra.mxu0 0.0
  %1159 = vmatprep.subr.mxu0 0.0
  %1160 = vmatpush1.msra.mxu0 0.0
  %1161 = vmatprep.subr.mxu0 0.0
  %1162 = vmatpush1.msra.mxu0 0.0
  %1163 = vmatprep.subr.mxu0 0.0
  %1164 = vmatpush1.msra.mxu0 0.0
  %1165 = vmatprep.subr.mxu0 0.0
  %1166 = vmatpush1.msra.mxu0 0.0
  %1167 = vmatprep.subr.mxu0 0.0
  %1168 = vmatpush1.msra.mxu0 0.0
  %1169 = vmatprep.subr.mxu0 0.0
  %1170 = vmatpush1.msra.mxu0 0.0
  %1171 = vmatprep.subr.mxu0 0.0
  %1172 = vmatpush1.msra.mxu0 0.0
  %1173 = vmatprep.subr.mxu0 0.0
  %1174 = vmatpush1.msra.mxu0 0.0
  %1175 = vmatprep.subr.mxu0 0.0
  %1176 = vmatpush1.msra.mxu0 0.0
  %1177 = vmatprep.subr.mxu0 0.0
  %1178 = vmatpush1.msra.mxu0 0.0
  %1179 = vmatprep.subr.mxu0 0.0
  %1180 = vmatpush1.msra.mxu0 0.0
  %1181 = vmatprep.subr.mxu0 0.0
  %1182 = vmatpush1.msra.mxu0 0.0
  %1183 = vmatprep.subr.mxu0 0.0
  %1184 = vmatpush1.msra.mxu0 0.0
  %1185 = vmatprep.subr.mxu0 0.0
  %1186 = vmatpush1.msra.mxu0 0.0
  %1187 = vmatprep.subr.mxu0 0.0
  %1188 = vmatpush1.msra.mxu0 0.0
  %1189 = vmatprep.subr.mxu0 0.0
  %1190 = vmatpush1.msra.mxu0 0.0
  %1191 = vmatprep.subr.mxu0 0.0
  %1192 = vmatpush1.msra.mxu0 0.0
  %1193 = vmatprep.mubr.f32.mxu0 0.0
  %1194 = vmatmul.mubr.f32.gmra.mrb[0].mxu0 %v78
  %v1195 = vpop.f32.mrb[0].mxu0
  %v1196 = vadd.f32 0.0, %v1195
  %v1197 = vpop.f32.mrb[0].mxu0
  %1198 = vmatprep.mubr.f32.mxu0 0.0
  %1199 = vmatmul.mubr.f32.gmra.mrb[0].mxu0 %v81
  %v1200 = vpop.f32.mrb[0].mxu0
  %v1201 = vadd.f32 0.0, %v1200
  %v1202 = vpop.f32.mrb[0].mxu0
  %1203 = vmatprep.mubr.f32.mxu0 0.0
  %1204 = vmatmul.mubr.f32.gmra.mrb[0].mxu0 %v84
  %v1205 = vpop.f32.mrb[0].mxu0
  %v1206 = vadd.f32 0.0, %v1205
  %v1207 = vpop.f32.mrb[0].mxu0
  %1208 = vmatprep.mubr.f32.mxu0 0.0
  %1209 = vmatmul.mubr.f32.gmra.mrb[0].mxu0 %v87
  %v1210 = vpop.f32.mrb[0].mxu0
  %v1211 = vadd.f32 0.0, %v1210
  %v1212 = vpop.f32.mrb[0].mxu0
  %1213 = vmatprep.mubr.f32.mxu0 0.0
  %1214 = vmatmul.mubr.f32.gmra.mrb[0].mxu0 %v90
  %v1215 = vpop.f32.mrb[0].mxu0
  %v1216 = vadd.f32 0.0, %v1215
  %v1217 = vpop.f32.mrb[0].mxu0
  %1218 = vmatprep.mubr.f32.mxu0 0.0
  %1219 = vmatmul.mubr.f32.gmra.mrb[0].mxu0 %v93
  %v1220 = vpop.f32.mrb[0].mxu0
  %v1221 = vadd.f32 0.0, %v1220
  %v1222 = vpop.f32.mrb[0].mxu0
  %1223 = vmatprep.mubr.f32.mxu0 0.0
  %1224 = vmatmul.mubr.f32.gmra.mrb[0].mxu0 %v96
  %v1225 = vpop.f32.mrb[0].mxu0
  %v1226 = vadd.f32 0.0, %v1225
  %v1227 = vpop.f32.mrb[0].mxu0
  %1228 = vmatprep.mubr.f32.mxu0 0.0
  %1229 = vmatmul.mubr.f32.gmra.mrb[0].mxu0 %v99
  %v1230 = vpop.f32.mrb[0].mxu0
  %v1231 = vadd.f32 0.0, %v1230
  %v1232 = vpop.f32.mrb[0].mxu0
  %1233 = vmatprep.mubr.f32.mxu0 0.0
  %1234 = vmatmul.mubr.f32.gmra.mrb[0].mxu0 %v102
  %v1235 = vpop.f32.mrb[0].mxu0
  %v1236 = vadd.f32 0.0, %v1235
  %v1237 = vpop.f32.mrb[0].mxu0
  %1238 = vmatprep.mubr.f32.mxu0 0.0
  %1239 = vmatmul.mubr.f32.gmra.mrb[0].mxu0 %v105
  %v1240 = vpop.f32.mrb[0].mxu0
  %v1241 = vadd.f32 0.0, %v1240
  %v1242 = vpop.f32.mrb[0].mxu0
  %1243 = vmatprep.mubr.f32.mxu0 0.0
  %1244 = vmatmul.mubr.f32.gmra.mrb[0].mxu0 %v108
  %v1245 = vpop.f32.mrb[0].mxu0
  %v1246 = vadd.f32 0.0, %v1245
  %v1247 = vpop.f32.mrb[0].mxu0
  %1248 = vmatprep.mubr.f32.mxu0 0.0
  %1249 = vmatmul.mubr.f32.gmra.mrb[0].mxu0 %v111
  %v1250 = vpop.f32.mrb[0].mxu0
  %v1251 = vadd.f32 0.0, %v1250
  %v1252 = vpop.f32.mrb[0].mxu0
  %1253 = vmatprep.mubr.f32.mxu0 0.0
  %1254 = vmatmul.mubr.f32.gmra.mrb[0].mxu0 %v114
  %v1255 = vpop.f32.mrb[0].mxu0
  %v1256 = vadd.f32 0.0, %v1255
  %v1257 = vpop.f32.mrb[0].mxu0
  %1258 = vmatprep.mubr.f32.mxu0 0.0
  %1259 = vmatmul.mubr.f32.gmra.mrb[0].mxu0 %v117
  %v1260 = vpop.f32.mrb[0].mxu0
  %v1261 = vadd.f32 0.0, %v1260
  %v1262 = vpop.f32.mrb[0].mxu0
  %1263 = vmatprep.mubr.f32.mxu0 0.0
  %1264 = vmatmul.mubr.f32.gmra.mrb[0].mxu0 %v120
  %v1265 = vpop.f32.mrb[0].mxu0
  %v1266 = vadd.f32 0.0, %v1265
  %v1267 = vpop.f32.mrb[0].mxu0
  %1268 = vmatprep.mubr.f32.mxu0 0.0
  %1269 = vmatmul.mubr.f32.gmra.mrb[0].mxu0 %v123
  %v1270 = vpop.f32.mrb[0].mxu0
  %v1271 = vadd.f32 0.0, %v1270
  %v1272 = vpop.f32.mrb[0].mxu0
  %1273 = vmatprep.mubr.f32.mxu0 0.0
  %1274 = vmatmul.mubr.f32.gmra.mrb[0].mxu0 %v126
  %v1275 = vpop.f32.mrb[0].mxu0
  %v1276 = vadd.f32 0.0, %v1275
  %v1277 = vpop.f32.mrb[0].mxu0
  %1278 = vmatprep.mubr.f32.mxu0 0.0
  %1279 = vmatmul.mubr.f32.gmra.mrb[0].mxu0 %v129
  %v1280 = vpop.f32.mrb[0].mxu0
  %v1281 = vadd.f32 0.0, %v1280
  %v1282 = vpop.f32.mrb[0].mxu0
  %1283 = vmatprep.mubr.f32.mxu0 0.0
  %1284 = vmatmul.mubr.f32.gmra.mrb[0].mxu0 %v132
  %v1285 = vpop.f32.mrb[0].mxu0
  %v1286 = vadd.f32 0.0, %v1285
  %v1287 = vpop.f32.mrb[0].mxu0
  %1288 = vmatprep.mubr.f32.mxu0 0.0
  %1289 = vmatmul.mubr.f32.gmra.mrb[0].mxu0 %v135
  %v1290 = vpop.f32.mrb[0].mxu0
  %v1291 = vadd.f32 0.0, %v1290
  %v1292 = vpop.f32.mrb[0].mxu0
  %1293 = vmatprep.mubr.f32.mxu0 0.0
  %1294 = vmatmul.mubr.f32.gmra.mrb[0].mxu0 %v138
  %v1295 = vpop.f32.mrb[0].mxu0
  %v1296 = vadd.f32 0.0, %v1295
  %v1297 = vpop.f32.mrb[0].mxu0
  %1298 = vmatprep.mubr.f32.mxu0 0.0
  %1299 = vmatmul.mubr.f32.gmra.mrb[0].mxu0 %v141
  %v1300 = vpop.f32.mrb[0].mxu0
  %v1301 = vadd.f32 0.0, %v1300
  %v1302 = vpop.f32.mrb[0].mxu0
  %1303 = vmatprep.mubr.f32.mxu0 0.0
  %1304 = vmatmul.mubr.f32.gmra.mrb[0].mxu0 %v144
  %v1305 = vpop.f32.mrb[0].mxu0
  %v1306 = vadd.f32 0.0, %v1305
  %v1307 = vpop.f32.mrb[0].mxu0
  %1308 = vmatprep.mubr.f32.mxu0 0.0
  %1309 = vmatmul.mubr.f32.gmra.mrb[0].mxu0 %v147
  %v1310 = vpop.f32.mrb[0].mxu0
  %v1311 = vadd.f32 0.0, %v1310
  %v1312 = vpop.f32.mrb[0].mxu0
  %1313 = vmatprep.mubr.f32.mxu0 0.0
  %1314 = vmatmul.mubr.f32.gmra.mrb[0].mxu0 %v150
  %v1315 = vpop.f32.mrb[0].mxu0
  %v1316 = vadd.f32 0.0, %v1315
  %v1317 = vpop.f32.mrb[0].mxu0
  %1318 = vmatprep.mubr.f32.mxu0 0.0
  %1319 = vmatmul.mubr.f32.gmra.mrb[0].mxu0 %v153
  %v1320 = vpop.f32.mrb[0].mxu0
  %v1321 = vadd.f32 0.0, %v1320
  %v1322 = vpop.f32.mrb[0].mxu0
  %1323 = vmatprep.mubr.f32.mxu0 0.0
  %1324 = vmatmul.mubr.f32.gmra.mrb[0].mxu0 %v156
  %v1325 = vpop.f32.mrb[0].mxu0
  %v1326 = vadd.f32 0.0, %v1325
  %v1327 = vpop.f32.mrb[0].mxu0
  %1328 = vmatprep.mubr.f32.mxu0 0.0
  %1329 = vmatmul.mubr.f32.gmra.mrb[0].mxu0 %v159
  %v1330 = vpop.f32.mrb[0].mxu0
  %v1331 = vadd.f32 0.0, %v1330
  %v1332 = vpop.f32.mrb[0].mxu0
  %1333 = vmatprep.mubr.f32.mxu0 0.0
  %1334 = vmatmul.mubr.f32.gmra.mrb[0].mxu0 %v162
  %v1335 = vpop.f32.mrb[0].mxu0
  %v1336 = vadd.f32 0.0, %v1335
  %v1337 = vpop.f32.mrb[0].mxu0
  %1338 = vmatprep.mubr.f32.mxu0 0.0
  %1339 = vmatmul.mubr.f32.gmra.mrb[0].mxu0 %v165
  %v1340 = vpop.f32.mrb[0].mxu0
  %v1341 = vadd.f32 0.0, %v1340
  %v1342 = vpop.f32.mrb[0].mxu0
  %1343 = vmatprep.mubr.f32.mxu0 0.0
  %1344 = vmatmul.mubr.f32.gmra.mrb[0].mxu0 %v168
  %v1345 = vpop.f32.mrb[0].mxu0
  %v1346 = vadd.f32 0.0, %v1345
  %v1347 = vpop.f32.mrb[0].mxu0
  %1348 = vmatprep.mubr.f32.mxu0 0.0
  %1349 = vmatmul.mubr.f32.gmra.mrb[0].mxu0 %v171
  %v1350 = vpop.f32.mrb[0].mxu0
  %v1351 = vadd.f32 0.0, %v1350
  %v1352 = vpop.f32.mrb[0].mxu0
  %1353 = vdwg.mxu0
  %v1354 = vadd.f32 %v969, %v1196
  %v1355 = vadd.f32 %v974, %v1201
  %v1356 = vadd.f32 %v979, %v1206
  %v1357 = vadd.f32 %v984, %v1211
  %v1358 = vadd.f32 %v989, %v1216
  %v1359 = vadd.f32 %v994, %v1221
  %v1360 = vadd.f32 %v999, %v1226
  %v1361 = vadd.f32 %v1004, %v1231
  %v1362 = vadd.f32 %v1009, %v1236
  %v1363 = vadd.f32 %v1014, %v1241
  %v1364 = vadd.f32 %v1019, %v1246
  %v1365 = vadd.f32 %v1024, %v1251
  %v1366 = vadd.f32 %v1029, %v1256
  %v1367 = vadd.f32 %v1034, %v1261
  %v1368 = vadd.f32 %v1039, %v1266
  %v1369 = vadd.f32 %v1044, %v1271
  %v1370 = vadd.f32 %v1049, %v1276
  %v1371 = vadd.f32 %v1054, %v1281
  %v1372 = vadd.f32 %v1059, %v1286
  %v1373 = vadd.f32 %v1064, %v1291
  %v1374 = vadd.f32 %v1069, %v1296
  %v1375 = vadd.f32 %v1074, %v1301
  %v1376 = vadd.f32 %v1079, %v1306
  %v1377 = vadd.f32 %v1084, %v1311
  %v1378 = vadd.f32 %v1089, %v1316
  %v1379 = vadd.f32 %v1094, %v1321
  %v1380 = vadd.f32 %v1099, %v1326
  %v1381 = vadd.f32 %v1104, %v1331
  %v1382 = vadd.f32 %v1109, %v1336
  %v1383 = vadd.f32 %v1114, %v1341
  %v1384 = vadd.f32 %v1119, %v1346
  %v1385 = vadd.f32 %v1124, %v1351
  %v1386 = vsel %vm76, %v1354, 0.0
  %1387 = vadd.xlane.f32.xlu0 %v1386
  %v1388 = vpop.xlane.xlu0 %1387
  %v1389 = vsel %vm76, %v1355, 0.0
  %1390 = vadd.xlane.f32.xlu0 %v1389
  %v1391 = vpop.xlane.xlu0 %1390
  %v1392 = vsel %vm76, %v1356, 0.0
  %1393 = vadd.xlane.f32.xlu0 %v1392
  %v1394 = vpop.xlane.xlu0 %1393
  %v1395 = vsel %vm76, %v1357, 0.0
  %1396 = vadd.xlane.f32.xlu0 %v1395
  %v1397 = vpop.xlane.xlu0 %1396
  %v1398 = vsel %vm76, %v1358, 0.0
  %1399 = vadd.xlane.f32.xlu0 %v1398
  %v1400 = vpop.xlane.xlu0 %1399
  %v1401 = vsel %vm76, %v1359, 0.0
  %1402 = vadd.xlane.f32.xlu0 %v1401
  %v1403 = vpop.xlane.xlu0 %1402
  %v1404 = vsel %vm76, %v1360, 0.0
  %1405 = vadd.xlane.f32.xlu0 %v1404
  %v1406 = vpop.xlane.xlu0 %1405
  %v1407 = vsel %vm76, %v1361, 0.0
  %1408 = vadd.xlane.f32.xlu0 %v1407
  %v1409 = vpop.xlane.xlu0 %1408
  %v1410 = vsel %vm76, %v1362, 0.0
  %1411 = vadd.xlane.f32.xlu0 %v1410
  %v1412 = vpop.xlane.xlu0 %1411
  %v1413 = vsel %vm76, %v1363, 0.0
  %1414 = vadd.xlane.f32.xlu0 %v1413
  %v1415 = vpop.xlane.xlu0 %1414
  %v1416 = vsel %vm76, %v1364, 0.0
  %1417 = vadd.xlane.f32.xlu0 %v1416
  %v1418 = vpop.xlane.xlu0 %1417
  %v1419 = vsel %vm76, %v1365, 0.0
  %1420 = vadd.xlane.f32.xlu0 %v1419
  %v1421 = vpop.xlane.xlu0 %1420
  %v1422 = vsel %vm76, %v1366, 0.0
  %1423 = vadd.xlane.f32.xlu0 %v1422
  %v1424 = vpop.xlane.xlu0 %1423
  %v1425 = vsel %vm76, %v1367, 0.0
  %1426 = vadd.xlane.f32.xlu0 %v1425
  %v1427 = vpop.xlane.xlu0 %1426
  %v1428 = vsel %vm76, %v1368, 0.0
  %1429 = vadd.xlane.f32.xlu0 %v1428
  %v1430 = vpop.xlane.xlu0 %1429
  %v1431 = vsel %vm76, %v1369, 0.0
  %1432 = vadd.xlane.f32.xlu0 %v1431
  %v1433 = vpop.xlane.xlu0 %1432
  %v1434 = vsel %vm76, %v1370, 0.0
  %1435 = vadd.xlane.f32.xlu0 %v1434
  %v1436 = vpop.xlane.xlu0 %1435
  %v1437 = vsel %vm76, %v1371, 0.0
  %1438 = vadd.xlane.f32.xlu0 %v1437
  %v1439 = vpop.xlane.xlu0 %1438
  %v1440 = vsel %vm76, %v1372, 0.0
  %1441 = vadd.xlane.f32.xlu0 %v1440
  %v1442 = vpop.xlane.xlu0 %1441
  %v1443 = vsel %vm76, %v1373, 0.0
  %1444 = vadd.xlane.f32.xlu0 %v1443
  %v1445 = vpop.xlane.xlu0 %1444
  %v1446 = vsel %vm76, %v1374, 0.0
  %1447 = vadd.xlane.f32.xlu0 %v1446
  %v1448 = vpop.xlane.xlu0 %1447
  %v1449 = vsel %vm76, %v1375, 0.0
  %1450 = vadd.xlane.f32.xlu0 %v1449
  %v1451 = vpop.xlane.xlu0 %1450
  %v1452 = vsel %vm76, %v1376, 0.0
  %1453 = vadd.xlane.f32.xlu0 %v1452
  %v1454 = vpop.xlane.xlu0 %1453
  %v1455 = vsel %vm76, %v1377, 0.0
  %1456 = vadd.xlane.f32.xlu0 %v1455
  %v1457 = vpop.xlane.xlu0 %1456
  %v1458 = vsel %vm76, %v1378, 0.0
  %1459 = vadd.xlane.f32.xlu0 %v1458
  %v1460 = vpop.xlane.xlu0 %1459
  %v1461 = vsel %vm76, %v1379, 0.0
  %1462 = vadd.xlane.f32.xlu0 %v1461
  %v1463 = vpop.xlane.xlu0 %1462
  %v1464 = vsel %vm76, %v1380, 0.0
  %1465 = vadd.xlane.f32.xlu0 %v1464
  %v1466 = vpop.xlane.xlu0 %1465
  %v1467 = vsel %vm76, %v1381, 0.0
  %1468 = vadd.xlane.f32.xlu0 %v1467
  %v1469 = vpop.xlane.xlu0 %1468
  %v1470 = vsel %vm76, %v1382, 0.0
  %1471 = vadd.xlane.f32.xlu0 %v1470
  %v1472 = vpop.xlane.xlu0 %1471
  %v1473 = vsel %vm76, %v1383, 0.0
  %1474 = vadd.xlane.f32.xlu0 %v1473
  %v1475 = vpop.xlane.xlu0 %1474
  %v1476 = vsel %vm76, %v1384, 0.0
  %1477 = vadd.xlane.f32.xlu0 %v1476
  %v1478 = vpop.xlane.xlu0 %1477
  %v1479 = vsel %vm76, %v1385, 0.0
  %1480 = vadd.xlane.f32.xlu0 %v1479
  %v1481 = vpop.xlane.xlu0 %1480
  %v1482 = vrcp.pop 16.0
  %v1483 = vmul.f32 %v1388, %v1482
  %v1484 = vmul.f32 %v1391, %v1482
  %v1485 = vmul.f32 %v1394, %v1482
  %v1486 = vmul.f32 %v1397, %v1482
  %v1487 = vmul.f32 %v1400, %v1482
  %v1488 = vmul.f32 %v1403, %v1482
  %v1489 = vmul.f32 %v1406, %v1482
  %v1490 = vmul.f32 %v1409, %v1482
  %v1491 = vmul.f32 %v1412, %v1482
  %v1492 = vmul.f32 %v1415, %v1482
  %v1493 = vmul.f32 %v1418, %v1482
  %v1494 = vmul.f32 %v1421, %v1482
  %v1495 = vmul.f32 %v1424, %v1482
  %v1496 = vmul.f32 %v1427, %v1482
  %v1497 = vmul.f32 %v1430, %v1482
  %v1498 = vmul.f32 %v1433, %v1482
  %v1499 = vmul.f32 %v1436, %v1482
  %v1500 = vmul.f32 %v1439, %v1482
  %v1501 = vmul.f32 %v1442, %v1482
  %v1502 = vmul.f32 %v1445, %v1482
  %v1503 = vmul.f32 %v1448, %v1482
  %v1504 = vmul.f32 %v1451, %v1482
  %v1505 = vmul.f32 %v1454, %v1482
  %v1506 = vmul.f32 %v1457, %v1482
  %v1507 = vmul.f32 %v1460, %v1482
  %v1508 = vmul.f32 %v1463, %v1482
  %v1509 = vmul.f32 %v1466, %v1482
  %v1510 = vmul.f32 %v1469, %v1482
  %v1511 = vmul.f32 %v1472, %v1482
  %v1512 = vmul.f32 %v1475, %v1482
  %v1513 = vmul.f32 %v1478, %v1482
  %v1514 = vmul.f32 %v1481, %v1482
  %v1515 = vsub.f32 %v1354, %v1483
  %v1516 = vsub.f32 %v1355, %v1484
  %v1517 = vsub.f32 %v1356, %v1485
  %v1518 = vsub.f32 %v1357, %v1486
  %v1519 = vsub.f32 %v1358, %v1487
  %v1520 = vsub.f32 %v1359, %v1488
  %v1521 = vsub.f32 %v1360, %v1489
  %v1522 = vsub.f32 %v1361, %v1490
  %v1523 = vsub.f32 %v1362, %v1491
  %v1524 = vsub.f32 %v1363, %v1492
  %v1525 = vsub.f32 %v1364, %v1493
  %v1526 = vsub.f32 %v1365, %v1494
  %v1527 = vsub.f32 %v1366, %v1495
  %v1528 = vsub.f32 %v1367, %v1496
  %v1529 = vsub.f32 %v1368, %v1497
  %v1530 = vsub.f32 %v1369, %v1498
  %v1531 = vsub.f32 %v1370, %v1499
  %v1532 = vsub.f32 %v1371, %v1500
  %v1533 = vsub.f32 %v1372, %v1501
  %v1534 = vsub.f32 %v1373, %v1502
  %v1535 = vsub.f32 %v1374, %v1503
  %v1536 = vsub.f32 %v1375, %v1504
  %v1537 = vsub.f32 %v1376, %v1505
  %v1538 = vsub.f32 %v1377, %v1506
  %v1539 = vsub.f32 %v1378, %v1507
  %v1540 = vsub.f32 %v1379, %v1508
  %v1541 = vsub.f32 %v1380, %v1509
  %v1542 = vsub.f32 %v1381, %v1510
  %v1543 = vsub.f32 %v1382, %v1511
  %v1544 = vsub.f32 %v1383, %v1512
  %v1545 = vsub.f32 %v1384, %v1513
  %v1546 = vsub.f32 %v1385, %v1514
  %v1547 = vmul.f32 %v1515, %v1515
  %v1548 = vmul.f32 %v1516, %v1516
  %v1549 = vmul.f32 %v1517, %v1517
  %v1550 = vmul.f32 %v1518, %v1518
  %v1551 = vmul.f32 %v1519, %v1519
  %v1552 = vmul.f32 %v1520, %v1520
  %v1553 = vmul.f32 %v1521, %v1521
  %v1554 = vmul.f32 %v1522, %v1522
  %v1555 = vmul.f32 %v1523, %v1523
  %v1556 = vmul.f32 %v1524, %v1524
  %v1557 = vmul.f32 %v1525, %v1525
  %v1558 = vmul.f32 %v1526, %v1526
  %v1559 = vmul.f32 %v1527, %v1527
  %v1560 = vmul.f32 %v1528, %v1528
  %v1561 = vmul.f32 %v1529, %v1529
  %v1562 = vmul.f32 %v1530, %v1530
  %v1563 = vmul.f32 %v1531, %v1531
  %v1564 = vmul.f32 %v1532, %v1532
  %v1565 = vmul.f32 %v1533, %v1533
  %v1566 = vmul.f32 %v1534, %v1534
  %v1567 = vmul.f32 %v1535, %v1535
  %v1568 = vmul.f32 %v1536, %v1536
  %v1569 = vmul.f32 %v1537, %v1537
  %v1570 = vmul.f32 %v1538, %v1538
  %v1571 = vmul.f32 %v1539, %v1539
  %v1572 = vmul.f32 %v1540, %v1540
  %v1573 = vmul.f32 %v1541, %v1541
  %v1574 = vmul.f32 %v1542, %v1542
  %v1575 = vmul.f32 %v1543, %v1543
  %v1576 = vmul.f32 %v1544, %v1544
  %v1577 = vmul.f32 %v1545, %v1545
  %v1578 = vmul.f32 %v1546, %v1546
  %v1579 = vsel %vm76, %v1547, 0.0
  %1580 = vadd.xlane.f32.xlu0 %v1579
  %v1581 = vpop.xlane.xlu0 %1580
  %v1582 = vsel %vm76, %v1548, 0.0
  %1583 = vadd.xlane.f32.xlu0 %v1582
  %v1584 = vpop.xlane.xlu0 %1583
  %v1585 = vsel %vm76, %v1549, 0.0
  %1586 = vadd.xlane.f32.xlu0 %v1585
  %v1587 = vpop.xlane.xlu0 %1586
  %v1588 = vsel %vm76, %v1550, 0.0
  %1589 = vadd.xlane.f32.xlu0 %v1588
  %v1590 = vpop.xlane.xlu0 %1589
  %v1591 = vsel %vm76, %v1551, 0.0
  %1592 = vadd.xlane.f32.xlu0 %v1591
  %v1593 = vpop.xlane.xlu0 %1592
  %v1594 = vsel %vm76, %v1552, 0.0
  %1595 = vadd.xlane.f32.xlu0 %v1594
  %v1596 = vpop.xlane.xlu0 %1595
  %v1597 = vsel %vm76, %v1553, 0.0
  %1598 = vadd.xlane.f32.xlu0 %v1597
  %v1599 = vpop.xlane.xlu0 %1598
  %v1600 = vsel %vm76, %v1554, 0.0
  %1601 = vadd.xlane.f32.xlu0 %v1600
  %v1602 = vpop.xlane.xlu0 %1601
  %v1603 = vsel %vm76, %v1555, 0.0
  %1604 = vadd.xlane.f32.xlu0 %v1603
  %v1605 = vpop.xlane.xlu0 %1604
  %v1606 = vsel %vm76, %v1556, 0.0
  %1607 = vadd.xlane.f32.xlu0 %v1606
  %v1608 = vpop.xlane.xlu0 %1607
  %v1609 = vsel %vm76, %v1557, 0.0
  %1610 = vadd.xlane.f32.xlu0 %v1609
  %v1611 = vpop.xlane.xlu0 %1610
  %v1612 = vsel %vm76, %v1558, 0.0
  %1613 = vadd.xlane.f32.xlu0 %v1612
  %v1614 = vpop.xlane.xlu0 %1613
  %v1615 = vsel %vm76, %v1559, 0.0
  %1616 = vadd.xlane.f32.xlu0 %v1615
  %v1617 = vpop.xlane.xlu0 %1616
  %v1618 = vsel %vm76, %v1560, 0.0
  %1619 = vadd.xlane.f32.xlu0 %v1618
  %v1620 = vpop.xlane.xlu0 %1619
  %v1621 = vsel %vm76, %v1561, 0.0
  %1622 = vadd.xlane.f32.xlu0 %v1621
  %v1623 = vpop.xlane.xlu0 %1622
  %v1624 = vsel %vm76, %v1562, 0.0
  %1625 = vadd.xlane.f32.xlu0 %v1624
  %v1626 = vpop.xlane.xlu0 %1625
  %v1627 = vsel %vm76, %v1563, 0.0
  %1628 = vadd.xlane.f32.xlu0 %v1627
  %v1629 = vpop.xlane.xlu0 %1628
  %v1630 = vsel %vm76, %v1564, 0.0
  %1631 = vadd.xlane.f32.xlu0 %v1630
  %v1632 = vpop.xlane.xlu0 %1631
  %v1633 = vsel %vm76, %v1565, 0.0
  %1634 = vadd.xlane.f32.xlu0 %v1633
  %v1635 = vpop.xlane.xlu0 %1634
  %v1636 = vsel %vm76, %v1566, 0.0
  %1637 = vadd.xlane.f32.xlu0 %v1636
  %v1638 = vpop.xlane.xlu0 %1637
  %v1639 = vsel %vm76, %v1567, 0.0
  %1640 = vadd.xlane.f32.xlu0 %v1639
  %v1641 = vpop.xlane.xlu0 %1640
  %v1642 = vsel %vm76, %v1568, 0.0
  %1643 = vadd.xlane.f32.xlu0 %v1642
  %v1644 = vpop.xlane.xlu0 %1643
  %v1645 = vsel %vm76, %v1569, 0.0
  %1646 = vadd.xlane.f32.xlu0 %v1645
  %v1647 = vpop.xlane.xlu0 %1646
  %v1648 = vsel %vm76, %v1570, 0.0
  %1649 = vadd.xlane.f32.xlu0 %v1648
  %v1650 = vpop.xlane.xlu0 %1649
  %v1651 = vsel %vm76, %v1571, 0.0
  %1652 = vadd.xlane.f32.xlu0 %v1651
  %v1653 = vpop.xlane.xlu0 %1652
  %v1654 = vsel %vm76, %v1572, 0.0
  %1655 = vadd.xlane.f32.xlu0 %v1654
  %v1656 = vpop.xlane.xlu0 %1655
  %v1657 = vsel %vm76, %v1573, 0.0
  %1658 = vadd.xlane.f32.xlu0 %v1657
  %v1659 = vpop.xlane.xlu0 %1658
  %v1660 = vsel %vm76, %v1574, 0.0
  %1661 = vadd.xlane.f32.xlu0 %v1660
  %v1662 = vpop.xlane.xlu0 %1661
  %v1663 = vsel %vm76, %v1575, 0.0
  %1664 = vadd.xlane.f32.xlu0 %v1663
  %v1665 = vpop.xlane.xlu0 %1664
  %v1666 = vsel %vm76, %v1576, 0.0
  %1667 = vadd.xlane.f32.xlu0 %v1666
  %v1668 = vpop.xlane.xlu0 %1667
  %v1669 = vsel %vm76, %v1577, 0.0
  %1670 = vadd.xlane.f32.xlu0 %v1669
  %v1671 = vpop.xlane.xlu0 %1670
  %v1672 = vsel %vm76, %v1578, 0.0
  %1673 = vadd.xlane.f32.xlu0 %v1672
  %v1674 = vpop.xlane.xlu0 %1673
  %v1675 = vmul.f32 %v1581, %v1482
  %v1676 = vmul.f32 %v1584, %v1482
  %v1677 = vmul.f32 %v1587, %v1482
  %v1678 = vmul.f32 %v1590, %v1482
  %v1679 = vmul.f32 %v1593, %v1482
  %v1680 = vmul.f32 %v1596, %v1482
  %v1681 = vmul.f32 %v1599, %v1482
  %v1682 = vmul.f32 %v1602, %v1482
  %v1683 = vmul.f32 %v1605, %v1482
  %v1684 = vmul.f32 %v1608, %v1482
  %v1685 = vmul.f32 %v1611, %v1482
  %v1686 = vmul.f32 %v1614, %v1482
  %v1687 = vmul.f32 %v1617, %v1482
  %v1688 = vmul.f32 %v1620, %v1482
  %v1689 = vmul.f32 %v1623, %v1482
  %v1690 = vmul.f32 %v1626, %v1482
  %v1691 = vmul.f32 %v1629, %v1482
  %v1692 = vmul.f32 %v1632, %v1482
  %v1693 = vmul.f32 %v1635, %v1482
  %v1694 = vmul.f32 %v1638, %v1482
  %v1695 = vmul.f32 %v1641, %v1482
  %v1696 = vmul.f32 %v1644, %v1482
  %v1697 = vmul.f32 %v1647, %v1482
  %v1698 = vmul.f32 %v1650, %v1482
  %v1699 = vmul.f32 %v1653, %v1482
  %v1700 = vmul.f32 %v1656, %v1482
  %v1701 = vmul.f32 %v1659, %v1482
  %v1702 = vmul.f32 %v1662, %v1482
  %v1703 = vmul.f32 %v1665, %v1482
  %v1704 = vmul.f32 %v1668, %v1482
  %v1705 = vmul.f32 %v1671, %v1482
  %v1706 = vmul.f32 %v1674, %v1482
  %v1707 = vadd.f32 %v1675, 1e-05
  %v1708 = vadd.f32 %v1676, 1e-05
  %v1709 = vadd.f32 %v1677, 1e-05
  %v1710 = vadd.f32 %v1678, 1e-05
  %v1711 = vadd.f32 %v1679, 1e-05
  %v1712 = vadd.f32 %v1680, 1e-05
  %v1713 = vadd.f32 %v1681, 1e-05
  %v1714 = vadd.f32 %v1682, 1e-05
  %v1715 = vadd.f32 %v1683, 1e-05
  %v1716 = vadd.f32 %v1684, 1e-05
  %v1717 = vadd.f32 %v1685, 1e-05
  %v1718 = vadd.f32 %v1686, 1e-05
  %v1719 = vadd.f32 %v1687, 1e-05
  %v1720 = vadd.f32 %v1688, 1e-05
  %v1721 = vadd.f32 %v1689, 1e-05
  %v1722 = vadd.f32 %v1690, 1e-05
  %v1723 = vadd.f32 %v1691, 1e-05
  %v1724 = vadd.f32 %v1692, 1e-05
  %v1725 = vadd.f32 %v1693, 1e-05
  %v1726 = vadd.f32 %v1694, 1e-05
  %v1727 = vadd.f32 %v1695, 1e-05
  %v1728 = vadd.f32 %v1696, 1e-05
  %v1729 = vadd.f32 %v1697, 1e-05
  %v1730 = vadd.f32 %v1698, 1e-05
  %v1731 = vadd.f32 %v1699, 1e-05
  %v1732 = vadd.f32 %v1700, 1e-05
  %v1733 = vadd.f32 %v1701, 1e-05
  %v1734 = vadd.f32 %v1702, 1e-05
  %v1735 = vadd.f32 %v1703, 1e-05
  %v1736 = vadd.f32 %v1704, 1e-05
  %v1737 = vadd.f32 %v1705, 1e-05
  %v1738 = vadd.f32 %v1706, 1e-05
  %v1739 = vrsqrt.pop %v1707
  %v1740 = vrsqrt.pop %v1708
  %v1741 = vrsqrt.pop %v1709
  %v1742 = vrsqrt.pop %v1710
  %v1743 = vrsqrt.pop %v1711
  %v1744 = vrsqrt.pop %v1712
  %v1745 = vrsqrt.pop %v1713
  %v1746 = vrsqrt.pop %v1714
  %v1747 = vrsqrt.pop %v1715
  %v1748 = vrsqrt.pop %v1716
  %v1749 = vrsqrt.pop %v1717
  %v1750 = vrsqrt.pop %v1718
  %v1751 = vrsqrt.pop %v1719
  %v1752 = vrsqrt.pop %v1720
  %v1753 = vrsqrt.pop %v1721
  %v1754 = vrsqrt.pop %v1722
  %v1755 = vrsqrt.pop %v1723
  %v1756 = vrsqrt.pop %v1724
  %v1757 = vrsqrt.pop %v1725
  %v1758 = vrsqrt.pop %v1726
  %v1759 = vrsqrt.pop %v1727
  %v1760 = vrsqrt.pop %v1728
  %v1761 = vrsqrt.pop %v1729
  %v1762 = vrsqrt.pop %v1730
  %v1763 = vrsqrt.pop %v1731
  %v1764 = vrsqrt.pop %v1732
  %v1765 = vrsqrt.pop %v1733
  %v1766 = vrsqrt.pop %v1734
  %v1767 = vrsqrt.pop %v1735
  %v1768 = vrsqrt.pop %v1736
  %v1769 = vrsqrt.pop %v1737
  %v1770 = vrsqrt.pop %v1738
  %v1771 = vmul.f32 %v1515, %v1739
  %v1772 = vmul.f32 %v1516, %v1740
  %v1773 = vmul.f32 %v1517, %v1741
  %v1774 = vmul.f32 %v1518, %v1742
  %v1775 = vmul.f32 %v1519, %v1743
  %v1776 = vmul.f32 %v1520, %v1744
  %v1777 = vmul.f32 %v1521, %v1745
  %v1778 = vmul.f32 %v1522, %v1746
  %v1779 = vmul.f32 %v1523, %v1747
  %v1780 = vmul.f32 %v1524, %v1748
  %v1781 = vmul.f32 %v1525, %v1749
  %v1782 = vmul.f32 %v1526, %v1750
  %v1783 = vmul.f32 %v1527, %v1751
  %v1784 = vmul.f32 %v1528, %v1752
  %v1785 = vmul.f32 %v1529, %v1753
  %v1786 = vmul.f32 %v1530, %v1754
  %v1787 = vmul.f32 %v1531, %v1755
  %v1788 = vmul.f32 %v1532, %v1756
  %v1789 = vmul.f32 %v1533, %v1757
  %v1790 = vmul.f32 %v1534, %v1758
  %v1791 = vmul.f32 %v1535, %v1759
  %v1792 = vmul.f32 %v1536, %v1760
  %v1793 = vmul.f32 %v1537, %v1761
  %v1794 = vmul.f32 %v1538, %v1762
  %v1795 = vmul.f32 %v1539, %v1763
  %v1796 = vmul.f32 %v1540, %v1764
  %v1797 = vmul.f32 %v1541, %v1765
  %v1798 = vmul.f32 %v1542, %v1766
  %v1799 = vmul.f32 %v1543, %v1767
  %v1800 = vmul.f32 %v1544, %v1768
  %v1801 = vmul.f32 %v1545, %v1769
  %v1802 = vmul.f32 %v1546, %v1770
  %v1803 = vld [vmem:[%s8] sm:$0x1]
  %v1805 = vlaneseq
  %v1806 = vshrl.u32 %v1805, 7
  %v1807 = vsub.s32 0, %v1806
  %v1808 = vrot.slane %v1803, %v1807
  %v1810 = vmul.f32 %v1771, %v1808
  %v1811 = vmul.f32 %v1772, %v1808
  %v1812 = vmul.f32 %v1773, %v1808
  %v1813 = vmul.f32 %v1774, %v1808
  %v1814 = vmul.f32 %v1775, %v1808
  %v1815 = vmul.f32 %v1776, %v1808
  %v1816 = vmul.f32 %v1777, %v1808
  %v1817 = vmul.f32 %v1778, %v1808
  %v1818 = vmul.f32 %v1779, %v1808
  %v1819 = vmul.f32 %v1780, %v1808
  %v1820 = vmul.f32 %v1781, %v1808
  %v1821 = vmul.f32 %v1782, %v1808
  %v1822 = vmul.f32 %v1783, %v1808
  %v1823 = vmul.f32 %v1784, %v1808
  %v1824 = vmul.f32 %v1785, %v1808
  %v1825 = vmul.f32 %v1786, %v1808
  %v1826 = vmul.f32 %v1787, %v1808
  %v1827 = vmul.f32 %v1788, %v1808
  %v1828 = vmul.f32 %v1789, %v1808
  %v1829 = vmul.f32 %v1790, %v1808
  %v1830 = vmul.f32 %v1791, %v1808
  %v1831 = vmul.f32 %v1792, %v1808
  %v1832 = vmul.f32 %v1793, %v1808
  %v1833 = vmul.f32 %v1794, %v1808
  %v1834 = vmul.f32 %v1795, %v1808
  %v1835 = vmul.f32 %v1796, %v1808
  %v1836 = vmul.f32 %v1797, %v1808
  %v1837 = vmul.f32 %v1798, %v1808
  %v1838 = vmul.f32 %v1799, %v1808
  %v1839 = vmul.f32 %v1800, %v1808
  %v1840 = vmul.f32 %v1801, %v1808
  %v1841 = vmul.f32 %v1802, %v1808
  %v1842 = vld [vmem:[%s9] sm:$0x1]
  %v1844 = vlaneseq
  %v1845 = vshrl.u32 %v1844, 7
  %v1846 = vsub.s32 0, %v1845
  %v1847 = vrot.slane %v1842, %v1846
  %v1849 = vadd.f32 %v1810, %v1847
  %v1850 = vadd.f32 %v1811, %v1847
  %v1851 = vadd.f32 %v1812, %v1847
  %v1852 = vadd.f32 %v1813, %v1847
  %v1853 = vadd.f32 %v1814, %v1847
  %v1854 = vadd.f32 %v1815, %v1847
  %v1855 = vadd.f32 %v1816, %v1847
  %v1856 = vadd.f32 %v1817, %v1847
  %v1857 = vadd.f32 %v1818, %v1847
  %v1858 = vadd.f32 %v1819, %v1847
  %v1859 = vadd.f32 %v1820, %v1847
  %v1860 = vadd.f32 %v1821, %v1847
  %v1861 = vadd.f32 %v1822, %v1847
  %v1862 = vadd.f32 %v1823, %v1847
  %v1863 = vadd.f32 %v1824, %v1847
  %v1864 = vadd.f32 %v1825, %v1847
  %v1865 = vadd.f32 %v1826, %v1847
  %v1866 = vadd.f32 %v1827, %v1847
  %v1867 = vadd.f32 %v1828, %v1847
  %v1868 = vadd.f32 %v1829, %v1847
  %v1869 = vadd.f32 %v1830, %v1847
  %v1870 = vadd.f32 %v1831, %v1847
  %v1871 = vadd.f32 %v1832, %v1847
  %v1872 = vadd.f32 %v1833, %v1847
  %v1873 = vadd.f32 %v1834, %v1847
  %v1874 = vadd.f32 %v1835, %v1847
  %v1875 = vadd.f32 %v1836, %v1847
  %v1876 = vadd.f32 %v1837, %v1847
  %v1877 = vadd.f32 %v1838, %v1847
  %v1878 = vadd.f32 %v1839, %v1847
  %v1879 = vadd.f32 %v1840, %v1847
  %v1880 = vadd.f32 %v1841, %v1847
  %1881 = vst.msk [vmem:[%s10] sm:$0xff] %vm76, %v1849
  %1882 = vst.msk [vmem:[%s10 + $0x8] sm:$0xff] %vm76, %v1850
  %1883 = vst.msk [vmem:[%s10 + $0x10] sm:$0xff] %vm76, %v1851
  %1884 = vst.msk [vmem:[%s10 + $0x18] sm:$0xff] %vm76, %v1852
  %1885 = vst.msk [vmem:[%s10 + $0x20] sm:$0xff] %vm76, %v1853
  %1886 = vst.msk [vmem:[%s10 + $0x28] sm:$0xff] %vm76, %v1854
  %1887 = vst.msk [vmem:[%s10 + $0x30] sm:$0xff] %vm76, %v1855
  %1888 = vst.msk [vmem:[%s10 + $0x38] sm:$0xff] %vm76, %v1856
  %1889 = vst.msk [vmem:[%s10 + $0x40] sm:$0xff] %vm76, %v1857
  %1890 = vst.msk [vmem:[%s10 + $0x48] sm:$0xff] %vm76, %v1858
  %1891 = vst.msk [vmem:[%s10 + $0x50] sm:$0xff] %vm76, %v1859
  %1892 = vst.msk [vmem:[%s10 + $0x58] sm:$0xff] %vm76, %v1860
  %1893 = vst.msk [vmem:[%s10 + $0x60] sm:$0xff] %vm76, %v1861
  %1894 = vst.msk [vmem:[%s10 + $0x68] sm:$0xff] %vm76, %v1862
  %1895 = vst.msk [vmem:[%s10 + $0x70] sm:$0xff] %vm76, %v1863
  %1896 = vst.msk [vmem:[%s10 + $0x78] sm:$0xff] %vm76, %v1864
  %1897 = vst.msk [vmem:[%s10 + $0x80] sm:$0xff] %vm76, %v1865
  %1898 = vst.msk [vmem:[%s10 + $0x88] sm:$0xff] %vm76, %v1866
  %1899 = vst.msk [vmem:[%s10 + $0x90] sm:$0xff] %vm76, %v1867
  %1900 = vst.msk [vmem:[%s10 + $0x98] sm:$0xff] %vm76, %v1868
  %1901 = vst.msk [vmem:[%s10 + $0xa0] sm:$0xff] %vm76, %v1869
  %1902 = vst.msk [vmem:[%s10 + $0xa8] sm:$0xff] %vm76, %v1870
  %1903 = vst.msk [vmem:[%s10 + $0xb0] sm:$0xff] %vm76, %v1871
  %1904 = vst.msk [vmem:[%s10 + $0xb8] sm:$0xff] %vm76, %v1872
  %1905 = vst.msk [vmem:[%s10 + $0xc0] sm:$0xff] %vm76, %v1873
  %1906 = vst.msk [vmem:[%s10 + $0xc8] sm:$0xff] %vm76, %v1874
  %1907 = vst.msk [vmem:[%s10 + $0xd0] sm:$0xff] %vm76, %v1875
  %1908 = vst.msk [vmem:[%s10 + $0xd8] sm:$0xff] %vm76, %v1876
  %1909 = vst.msk [vmem:[%s10 + $0xe0] sm:$0xff] %vm76, %v1877
  %1910 = vst.msk [vmem:[%s10 + $0xe8] sm:$0xff] %vm76, %v1878
  %1911 = vst.msk [vmem:[%s10 + $0xf0] sm:$0xff] %vm76, %v1879
  %1912 = vst.msk [vmem:[%s10 + $0xf8] sm:$0xff] %vm76, %v1880
  // Predicated region
  $region42: #{mlp_forward.1} parent=0 // pred_check
    _
  $region43: #{mlp_forward.1} parent=0 // pred_check_branch
    %1914 = sbr.rel (0) target = $region45
  $region44: #{mlp_forward.1} parent=0 // pred_region
    _
  $region45: #{mlp_forward.1} parent=0 // pred_fallthru
    _
  // Predicated region
  $region46: #{mlp_forward.1} parent=0 // pred_check
    _
  $region47: #{mlp_forward.1} parent=0 // pred_check_branch
    %1916 = sbr.rel (0) target = $region49
  $region48: #{mlp_forward.1} parent=0 // pred_region
    _
  $region49: #{mlp_forward.1} parent=0 // pred_fallthru
    _

</llo_original>
